<compile_context>
chip_gen: v7x
topology: tpu7x:2x2x1
jax: 0.10.0
libtpu: 0.0.40
codegen_flags: <defaults>
</compile_context>

<pallas_src>
import math

import jax
import jax.numpy as jnp
from jax import lax
from jax.experimental import pallas as pl
from jax.experimental.pallas import tpu as pltpu


# ----------------------------------------------------------------------------
# Fused DiscBlock kernel
# ----------------------------------------------------------------------------

def _make_kernel(H, W, Cin, Cout, downsample, use_conv0):
    HW = H * W
    N_TAPS = 10  # 9 relu'd 3x3 taps + pre-ReLU center tap (skip path)

    # Group taps so every im2col store is a full, lane-aligned 128-wide store.
    if Cin % 128 == 0:
        group = 1
    elif 128 % Cin == 0:
        group = 128 // Cin          # Cin=64 -> 2 taps per store
    else:
        group = 1                   # fallback: masked stores

    def kernel(*refs):
        it = iter(refs)
        xp_ref = next(it)                               # (H+2, W+2, Cin) f32, zero-pad, pre-ReLU
        wf_ref = next(it)                               # (10*Cin, Nout) bf16 fused weight
        bf_ref = next(it)                               # (1, Nout) f32 fused bias
        pool_ref = next(it) if downsample else None     # (Mout, HW) bf16 avg-pool matrix
        o_ref = next(it)                                # (Mout or HW, Cout) f32
        patch_ref = next(it)                            # scratch (HW, 10*Cin) bf16

        xp = xp_ref[...]
        xr = jnp.maximum(xp, 0.2 * xp)                  # LeakyReLU(0.2) in f32; 0-padding invariant

        # --- im2col taps + recovered pre-ReLU center tap (skip path) ----------
        taps = [xr[ky:ky + H, kx:kx + W, :].reshape(HW, Cin)
                for ky in range(3) for kx in range(3)]
        center_relu = taps[4]
        center_pre = jnp.where(center_relu >= 0, center_relu, 5.0 * center_relu)
        taps.append(center_pre)

        # Lane-aligned 128-wide bf16 stores into the patch scratch.
        t = 0
        while t < N_TAPS:
            t1 = min(t + group, N_TAPS)
            chunk = taps[t] if t1 == t + 1 else jnp.concatenate(taps[t:t1], axis=-1)
            patch_ref[:, t * Cin:t1 * Cin] = chunk.astype(jnp.bfloat16)
            t = t1

        # --- single fused MXU matmul: [conv3x3 | skip 1x1] block-diag weight ---
        y = jnp.dot(patch_ref[...], wf_ref[...],
                    preferred_element_type=jnp.float32) + bf_ref[...]
        h = y[:, :Cout]
        h = jnp.maximum(h, 0.2 * h)                     # LeakyReLU after snconv2d1 (f32)
        x0 = y[:, Cout:] if use_conv0 else center_pre   # conv0(x)+b0, or identity skip

        # Pooling is linear: add the two paths first, pool once.
        z = h + x0
        if downsample:
            z = jnp.dot(pool_ref[...], z.astype(jnp.bfloat16),
                        preferred_element_type=jnp.float32)
        o_ref[...] = z

    return kernel


def _pool_matrix(H, W):
    """(Hout*Wout, H*W) matrix implementing 2x2 average pooling on row-major HW."""
    Hout, Wout = H // 2, W // 2
    out_idx = jnp.arange(Hout * Wout)
    oy, ox = out_idx // Wout, out_idx % Wout
    in_idx = jnp.arange(H * W)
    iy, ix = in_idx // W, in_idx % W
    mask = ((iy[None, :] // 2) == oy[:, None]) & ((ix[None, :] // 2) == ox[:, None])
    return jnp.where(mask, jnp.float32(0.25), jnp.float32(0.0))


def disc_block_forward(params, x_nchw, downsample=True):
    """DiscBlock.forward.  x_nchw: (B, Cin, H, W) f32 -> (B, Cout, Hout, Wout) f32."""
    B, Cin, H, W = x_nchw.shape
    Cout = params["b1"].shape[1]
    ch_mismatch = Cin != Cout
    use_conv0 = downsample or ch_mismatch
    Hout, Wout = (H // 2, W // 2) if downsample else (H, W)
    M = Hout * Wout
    HW = H * W
    Nout = 2 * Cout if use_conv0 else Cout

    # Layout plumbing (XLA side): NCHW -> NHWC (channels on lanes) + halo pad.
    x = jnp.transpose(x_nchw, (0, 2, 3, 1))
    x_pad = jnp.pad(x, ((0, 0), (1, 1), (1, 1), (0, 0)))

    # Fused block-diagonal weight [[w1, 0], [0, w0]] and bias [b1 | b0], bf16 for MXU.
    w1, b1 = params["w1"], params["b1"]
    if use_conv0:
        w0, b0 = params["w0"], params["b0"]
        wf = jnp.concatenate(
            [jnp.concatenate([w1, jnp.zeros((9 * Cin, Cout), jnp.float32)], axis=1),
             jnp.concatenate([jnp.zeros((Cin, Cout), jnp.float32), w0], axis=1)],
            axis=0)
        bias = jnp.concatenate([b1, b0], axis=1)
    else:
        wf = jnp.concatenate([w1, jnp.zeros((Cin, Cout), jnp.float32)], axis=0)
        bias = b1
    wf = wf.astype(jnp.bfloat16)

    operands = [x_pad, wf, bias]
    in_specs = [
        pl.BlockSpec((None, H + 2, W + 2, Cin), lambda b: (b, 0, 0, 0)),
        pl.BlockSpec((10 * Cin, Nout), lambda b: (0, 0)),
        pl.BlockSpec((1, Nout), lambda b: (0, 0)),
    ]
    flops = 2 * B * HW * (10 * Cin) * Nout
    bytes_accessed = x_pad.size * 4 + wf.size * 2 + bias.size * 4 + B * M * Cout * 4
    if downsample:
        pool = _pool_matrix(H, W).astype(jnp.bfloat16)
        operands.append(pool)
        in_specs.append(pl.BlockSpec((M, HW), lambda b: (0, 0)))
        flops += 2 * B * M * HW * Cout
        bytes_accessed += pool.size * 2

    out = pl.pallas_call(
        _make_kernel(H, W, Cin, Cout, downsample, use_conv0),
        out_shape=jax.ShapeDtypeStruct((B, M, Cout), jnp.float32),
        grid=(B,),
        in_specs=in_specs,
        out_specs=pl.BlockSpec((None, M, Cout), lambda b: (b, 0, 0)),
        scratch_shapes=[pltpu.VMEM((HW, 10 * Cin), jnp.bfloat16)],
        compiler_params=pltpu.CompilerParams(
            dimension_semantics=("parallel",),
            vmem_limit_bytes=32 * 1024 * 1024),
        cost_estimate=pl.CostEstimate(
            flops=flops, transcendentals=0, bytes_accessed=bytes_accessed),
    )(*operands)

    out = out.reshape(B, Hout, Wout, Cout)
    return jnp.transpose(out, (0, 3, 1, 2))                 # back to NCHW


# ----------------------------------------------------------------------------
# Pure-JAX reference (f32, HIGHEST precision) for in-script correctness check
# ----------------------------------------------------------------------------

def disc_block_reference(params, x, downsample=True):
    B, Cin, H, W = x.shape
    Cout = params["b1"].shape[1]
    ch_mismatch = Cin != Cout
    w1 = params["w1"].reshape(3, 3, Cin, Cout)               # HWIO

    h = jnp.maximum(x, 0.2 * x)
    h = lax.conv_general_dilated(
        h, w1, window_strides=(1, 1), padding=((1, 1), (1, 1)),
        dimension_numbers=("NCHW", "HWIO", "NCHW"),
        precision=lax.Precision.HIGHEST)
    h = h + params["b1"].reshape(1, Cout, 1, 1)
    h = jnp.maximum(h, 0.2 * h)
    if downsample:
        h = h.reshape(B, Cout, H // 2, 2, W // 2, 2).mean(axis=(3, 5))

    x0 = x
    if downsample or ch_mismatch:
        x0 = jnp.einsum("bihw,io->bohw", x0, params["w0"],
                        precision=lax.Precision.HIGHEST)
        x0 = x0 + params["b0"].reshape(1, Cout, 1, 1)
        if downsample:
            x0 = x0.reshape(B, Cout, H // 2, 2, W // 2, 2).mean(axis=(3, 5))
    return h + x0


# ----------------------------------------------------------------------------
# Deterministic synthetic parameters (spectral norm as param preprocessing)
# ----------------------------------------------------------------------------

def _xavier(key, shape, fan_in, fan_out):
    bound = math.sqrt(6.0 / (fan_in + fan_out))
    return jax.random.uniform(key, shape, jnp.float32, minval=-bound, maxval=bound)


def _spectral_norm(w, key, eps=1e-12):
    """One power iteration, matching nn.utils.spectral_norm at forward time."""
    m = w.reshape(w.shape[0], -1)
    u = jax.random.normal(key, (m.shape[0],), jnp.float32)
    u = u / (jnp.linalg.norm(u) + eps)
    v = m.T @ u
    v = v / (jnp.linalg.norm(v) + eps)
    u = m @ v
    u = u / (jnp.linalg.norm(u) + eps)
    sigma = u @ (m @ v)
    return w / sigma


def init_disc_block_params(key, cin, cout):
    k1, k0, kb1, kb0 = jax.random.split(key, 4)
    # snconv2d1: 3x3, cin -> cout, im2col layout (ky,kx,cin) x cout
    w1 = _xavier(k1, (cout, cin, 3, 3), cin * 9, cout * 9)
    w1 = _spectral_norm(w1, jax.random.fold_in(k1, 1))
    w1 = jnp.transpose(w1, (2, 3, 1, 0)).reshape(9 * cin, cout)
    # snconv2d0: 1x1 skip, cin -> cout
    w0 = _xavier(k0, (cout, cin, 1, 1), cin, cout)
    w0 = _spectral_norm(w0, jax.random.fold_in(k0, 1))
    w0 = w0[:, :, 0, 0].T                                        # (cin, cout)
    b1 = 0.1 * jax.random.normal(kb1, (1, cout), jnp.float32)
    b0 = 0.1 * jax.random.normal(kb0, (1, cout), jnp.float32)
    # NOTE: snconv2d2 exists in DiscBlock.__init__ but is never used in forward().
    return dict(w1=w1, b1=b1, w0=w0, b0=b0)


# ----------------------------------------------------------------------------
# Main
# ----------------------------------------------------------------------------

if __name__ == "__main__":
    B, CIN, COUT, H, W = 2, 64, 128, 16, 16

    key = jax.random.PRNGKey(0)
    kx, kp = jax.random.split(key)
    x = jax.random.normal(kx, (B, CIN, H, W), jnp.float32)
    params = init_disc_block_params(kp, CIN, COUT)

    fwd = jax.jit(disc_block_forward, static_argnames=("downsample",))

    # bf16 MXU inputs (f32 accumulation) vs f32 HIGHEST reference -> ~1e-2 drift.
    TOL = 2.5e-2

    # Case 1: default forward (downsample=True, channel mismatch).
    out = jax.block_until_ready(fwd(params, x, downsample=True))
    assert out.shape == (B, COUT, H // 2, W // 2), out.shape
    assert bool(jnp.all(jnp.isfinite(out)))
    ref = disc_block_reference(params, x, downsample=True)
    err = float(jnp.max(jnp.abs(out - ref)))
    assert err < TOL, f"downsample=True mismatch vs reference: {err}"

    # Case 2: downsample=False (skip conv still applied because Cin != Cout).
    out2 = jax.block_until_ready(fwd(params, x, downsample=False))
    assert out2.shape == (B, COUT, H, W), out2.shape
    ref2 = disc_block_reference(params, x, downsample=False)
    err2 = float(jnp.max(jnp.abs(out2 - ref2)))
    assert err2 < TOL, f"downsample=False mismatch vs reference: {err2}"

    print("KERNEL_OK")
</pallas_src>

<mosaic_0001>
module attributes {stable_mosaic.version = 11 : i64} {
  func.func @kernel(%arg0: i32, %arg1: memref<1x18x18x64xf32, #tpu.memory_space<vmem>>, %arg2: memref<640x256xbf16, #tpu.memory_space<vmem>>, %arg3: memref<1x256xf32, #tpu.memory_space<vmem>>, %arg4: memref<64x256xbf16, #tpu.memory_space<vmem>>, %arg5: memref<1x64x128xf32, #tpu.memory_space<vmem>>, %arg6: memref<256x640xbf16, #tpu.memory_space<vmem>>) attributes {dimension_semantics = [#tpu.dimension_semantics<parallel>], iteration_bounds = array<i64: 2>, scalar_prefetch = 0 : i64, scratch_operands = 1 : i64, tpu.core_type = #tpu.core_type<tc>, window_params = [{transform_indices = @transform_0, window_bounds = array<i64: 1, 18, 18, 64>}, {pipeline_mode = #tpu.pipeline_mode<synchronous>, transform_indices = @transform_1, window_bounds = array<i64: 640, 256>}, {pipeline_mode = #tpu.pipeline_mode<synchronous>, transform_indices = @transform_2, window_bounds = array<i64: 1, 256>}, {pipeline_mode = #tpu.pipeline_mode<synchronous>, transform_indices = @transform_3, window_bounds = array<i64: 64, 256>}, {transform_indices = @transform_4, window_bounds = array<i64: 1, 64, 128>}]} {
    %c0 = arith.constant 0 : index
    %c0_0 = arith.constant 0 : index
    %c0_1 = arith.constant 0 : index
    %c0_2 = arith.constant 0 : index
    %0 = vector.load %arg1[%c0, %c0_0, %c0_1, %c0_2] : memref<1x18x18x64xf32, #tpu.memory_space<vmem>>, vector<1x18x18x64xf32>
    %1 = vector.shape_cast %0 : vector<1x18x18x64xf32> to vector<18x18x64xf32>
    %cst = arith.constant 2.000000e-01 : f32
    %2 = vector.broadcast %cst : f32 to vector<18x18x64xf32>
    %3 = arith.mulf %2, %1 : vector<18x18x64xf32>
    %4 = arith.maximumf %1, %3 : vector<18x18x64xf32>
    %5 = vector.extract_strided_slice %4 {offsets = [0, 0, 0], sizes = [16, 16, 64], strides = [1, 1, 1]} : vector<18x18x64xf32> to vector<16x16x64xf32>
    %6 = vector.shape_cast %5 : vector<16x16x64xf32> to vector<256x64xf32>
    %7 = vector.extract_strided_slice %4 {offsets = [0, 1, 0], sizes = [16, 16, 64], strides = [1, 1, 1]} : vector<18x18x64xf32> to vector<16x16x64xf32>
    %8 = vector.shape_cast %7 : vector<16x16x64xf32> to vector<256x64xf32>
    %9 = vector.extract_strided_slice %4 {offsets = [0, 2, 0], sizes = [16, 16, 64], strides = [1, 1, 1]} : vector<18x18x64xf32> to vector<16x16x64xf32>
    %10 = vector.shape_cast %9 : vector<16x16x64xf32> to vector<256x64xf32>
    %11 = vector.extract_strided_slice %4 {offsets = [1, 0, 0], sizes = [16, 16, 64], strides = [1, 1, 1]} : vector<18x18x64xf32> to vector<16x16x64xf32>
    %12 = vector.shape_cast %11 : vector<16x16x64xf32> to vector<256x64xf32>
    %13 = vector.extract_strided_slice %4 {offsets = [1, 1, 0], sizes = [16, 16, 64], strides = [1, 1, 1]} : vector<18x18x64xf32> to vector<16x16x64xf32>
    %14 = vector.shape_cast %13 : vector<16x16x64xf32> to vector<256x64xf32>
    %15 = vector.extract_strided_slice %4 {offsets = [1, 2, 0], sizes = [16, 16, 64], strides = [1, 1, 1]} : vector<18x18x64xf32> to vector<16x16x64xf32>
    %16 = vector.shape_cast %15 : vector<16x16x64xf32> to vector<256x64xf32>
    %17 = vector.extract_strided_slice %4 {offsets = [2, 0, 0], sizes = [16, 16, 64], strides = [1, 1, 1]} : vector<18x18x64xf32> to vector<16x16x64xf32>
    %18 = vector.shape_cast %17 : vector<16x16x64xf32> to vector<256x64xf32>
    %19 = vector.extract_strided_slice %4 {offsets = [2, 1, 0], sizes = [16, 16, 64], strides = [1, 1, 1]} : vector<18x18x64xf32> to vector<16x16x64xf32>
    %20 = vector.shape_cast %19 : vector<16x16x64xf32> to vector<256x64xf32>
    %21 = vector.extract_strided_slice %4 {offsets = [2, 2, 0], sizes = [16, 16, 64], strides = [1, 1, 1]} : vector<18x18x64xf32> to vector<16x16x64xf32>
    %22 = vector.shape_cast %21 : vector<16x16x64xf32> to vector<256x64xf32>
    %cst_3 = arith.constant 0.000000e+00 : f32
    %23 = vector.broadcast %cst_3 : f32 to vector<256x64xf32>
    %24 = arith.cmpf oge, %14, %23 : vector<256x64xf32>
    %cst_4 = arith.constant 5.000000e+00 : f32
    %25 = vector.broadcast %cst_4 : f32 to vector<256x64xf32>
    %26 = arith.mulf %25, %14 : vector<256x64xf32>
    %27 = arith.select %24, %14, %26 : vector<256x64xi1>, vector<256x64xf32>
    %28 = tpu.concatenate %6, %8 in 1 : vector<256x64xf32>, vector<256x64xf32> -> vector<256x128xf32>
    %29 = arith.truncf %28 : vector<256x128xf32> to vector<256x128xbf16>
    %c0_5 = arith.constant 0 : index
    %c0_6 = arith.constant 0 : index
    %30 = vector.load %arg6[%c0_5, %c0_6] : memref<256x640xbf16, #tpu.memory_space<vmem>>, vector<256x128xbf16>
    tpu.vector_store %arg6[%c0_5, %c0_6], %29 {strides = array<i32>} : memref<256x640xbf16, #tpu.memory_space<vmem>>, vector<256x128xbf16>,
    %31 = tpu.concatenate %10, %12 in 1 : vector<256x64xf32>, vector<256x64xf32> -> vector<256x128xf32>
    %32 = arith.truncf %31 : vector<256x128xf32> to vector<256x128xbf16>
    %c0_7 = arith.constant 0 : index
    %c128 = arith.constant 128 : index
    %33 = vector.load %arg6[%c0_7, %c128] : memref<256x640xbf16, #tpu.memory_space<vmem>>, vector<256x128xbf16>
    tpu.vector_store %arg6[%c0_7, %c128], %32 {strides = array<i32>} : memref<256x640xbf16, #tpu.memory_space<vmem>>, vector<256x128xbf16>,
    %34 = tpu.concatenate %14, %16 in 1 : vector<256x64xf32>, vector<256x64xf32> -> vector<256x128xf32>
    %35 = arith.truncf %34 : vector<256x128xf32> to vector<256x128xbf16>
    %c0_8 = arith.constant 0 : index
    %c256 = arith.constant 256 : index
    %36 = vector.load %arg6[%c0_8, %c256] : memref<256x640xbf16, #tpu.memory_space<vmem>>, vector<256x128xbf16>
    tpu.vector_store %arg6[%c0_8, %c256], %35 {strides = array<i32>} : memref<256x640xbf16, #tpu.memory_space<vmem>>, vector<256x128xbf16>,
    %37 = tpu.concatenate %18, %20 in 1 : vector<256x64xf32>, vector<256x64xf32> -> vector<256x128xf32>
    %38 = arith.truncf %37 : vector<256x128xf32> to vector<256x128xbf16>
    %c0_9 = arith.constant 0 : index
    %c384 = arith.constant 384 : index
    %39 = vector.load %arg6[%c0_9, %c384] : memref<256x640xbf16, #tpu.memory_space<vmem>>, vector<256x128xbf16>
    tpu.vector_store %arg6[%c0_9, %c384], %38 {strides = array<i32>} : memref<256x640xbf16, #tpu.memory_space<vmem>>, vector<256x128xbf16>,
    %40 = tpu.concatenate %22, %27 in 1 : vector<256x64xf32>, vector<256x64xf32> -> vector<256x128xf32>
    %41 = arith.truncf %40 : vector<256x128xf32> to vector<256x128xbf16>
    %c0_10 = arith.constant 0 : index
    %c512 = arith.constant 512 : index
    %42 = vector.load %arg6[%c0_10, %c512] : memref<256x640xbf16, #tpu.memory_space<vmem>>, vector<256x128xbf16>
    tpu.vector_store %arg6[%c0_10, %c512], %41 {strides = array<i32>} : memref<256x640xbf16, #tpu.memory_space<vmem>>, vector<256x128xbf16>,
    %c0_11 = arith.constant 0 : index
    %c0_12 = arith.constant 0 : index
    %43 = vector.load %arg6[%c0_11, %c0_12] : memref<256x640xbf16, #tpu.memory_space<vmem>>, vector<256x640xbf16>
    %c0_13 = arith.constant 0 : index
    %c0_14 = arith.constant 0 : index
    %44 = vector.load %arg2[%c0_13, %c0_14] : memref<640x256xbf16, #tpu.memory_space<vmem>>, vector<640x256xbf16>
    %cst_15 = arith.constant dense<0.000000e+00> : vector<256x256xf32>
    %45 = tpu.matmul %43, %44, %cst_15 {dimension_numbers = #tpu.dot_dimension_numbers<[1], [0], [0], [1], [0, 0, 1, 1], [], []>} : vector<256x640xbf16>, vector<640x256xbf16>, vector<256x256xf32> -> vector<256x256xf32>
    %c0_16 = arith.constant 0 : index
    %c0_17 = arith.constant 0 : index
    %46 = vector.load %arg3[%c0_16, %c0_17] : memref<1x256xf32, #tpu.memory_space<vmem>>, vector<1x256xf32>
    %47 = vector.broadcast %46 : vector<1x256xf32> to vector<256x256xf32>
    %48 = arith.addf %45, %47 : vector<256x256xf32>
    %49 = vector.extract_strided_slice %48 {offsets = [0, 0], sizes = [256, 128], strides = [1, 1]} : vector<256x256xf32> to vector<256x128xf32>
    %cst_18 = arith.constant 2.000000e-01 : f32
    %50 = vector.broadcast %cst_18 : f32 to vector<256x128xf32>
    %51 = arith.mulf %50, %49 : vector<256x128xf32>
    %52 = arith.maximumf %49, %51 : vector<256x128xf32>
    %53 = vector.extract_strided_slice %48 {offsets = [0, 128], sizes = [256, 128], strides = [1, 1]} : vector<256x256xf32> to vector<256x128xf32>
    %54 = arith.addf %52, %53 : vector<256x128xf32>
    %c0_19 = arith.constant 0 : index
    %c0_20 = arith.constant 0 : index
    %55 = vector.load %arg4[%c0_19, %c0_20] : memref<64x256xbf16, #tpu.memory_space<vmem>>, vector<64x256xbf16>
    %56 = arith.truncf %54 : vector<256x128xf32> to vector<256x128xbf16>
    %cst_21 = arith.constant dense<0.000000e+00> : vector<64x128xf32>
    %57 = tpu.matmul %55, %56, %cst_21 {dimension_numbers = #tpu.dot_dimension_numbers<[1], [0], [0], [1], [0, 0, 1, 1], [], []>} : vector<64x256xbf16>, vector<256x128xbf16>, vector<64x128xf32> -> vector<64x128xf32>
    %c0_22 = arith.constant 0 : index
    %c0_23 = arith.constant 0 : index
    %c0_24 = arith.constant 0 : index
    %58 = vector.load %arg5[%c0_22, %c0_23, %c0_24] : memref<1x64x128xf32, #tpu.memory_space<vmem>>, vector<1x64x128xf32>
    %59 = vector.shape_cast %58 : vector<1x64x128xf32> to vector<64x128xf32>
    %60 = vector.shape_cast %57 : vector<64x128xf32> to vector<1x64x128xf32>
    tpu.vector_store %arg5[%c0_22, %c0_23, %c0_24], %60 {strides = array<i32>} : memref<1x64x128xf32, #tpu.memory_space<vmem>>, vector<1x64x128xf32>,
    return
  }
  func.func @transform_0(%arg0: i32) -> (i32, i32, i32, i32) {
    %c0_i32 = arith.constant 0 : i32
    %c0_i32_0 = arith.constant 0 : i32
    %c0_i32_1 = arith.constant 0 : i32
    %c0_i32_2 = arith.constant 0 : i32
    return %arg0, %c0_i32, %c0_i32_0, %c0_i32_1 : i32, i32, i32, i32
  }
  func.func @transform_1(%arg0: i32) -> (i32, i32) {
    %c0_i32 = arith.constant 0 : i32
    %c0_i32_0 = arith.constant 0 : i32
    %c0_i32_1 = arith.constant 0 : i32
    return %c0_i32, %c0_i32_0 : i32, i32
  }
  func.func @transform_2(%arg0: i32) -> (i32, i32) {
    %c0_i32 = arith.constant 0 : i32
    %c0_i32_0 = arith.constant 0 : i32
    %c0_i32_1 = arith.constant 0 : i32
    return %c0_i32, %c0_i32_0 : i32, i32
  }
  func.func @transform_3(%arg0: i32) -> (i32, i32) {
    %c0_i32 = arith.constant 0 : i32
    %c0_i32_0 = arith.constant 0 : i32
    %c0_i32_1 = arith.constant 0 : i32
    return %c0_i32, %c0_i32_0 : i32, i32
  }
  func.func @transform_4(%arg0: i32) -> (i32, i32, i32) {
    %c0_i32 = arith.constant 0 : i32
    %c0_i32_0 = arith.constant 0 : i32
    %c0_i32_1 = arith.constant 0 : i32
    return %arg0, %c0_i32, %c0_i32_0 : i32, i32, i32
  }
}

</mosaic_0001>

<llo_original>
// kernel: disc_block_forward.1
$region0: #{disc_block_forward.1}
  #allocation0 [shape = 'u32[]', space=smem, size = 0x4, offset = 0x4, fixed_abs, tag = 'smem constant byte address 0x4 - core index']
  #allocation1 [shape = 'u32[144,128]{1,0:T(1,128)}', space=vmem, size = 0x12000, scoped, tag = 'internal scratch']
  #allocation2 [shape = 'bf16[256,640]{1,0:T(16,128)(2,1)}', space=vmem, size = 0x50000, scoped, tag = 'scratch operand']
  %s0 = inlined_call_operand.vmem [shape: f32[2,18,18,64], index: 0, kind: input, shape index: {}]
  %s1 = inlined_call_operand.vmem [shape: bf16[640,256], index: 1, kind: input, shape index: {}]
  %s2 = inlined_call_operand.vmem [shape: f32[1,256], index: 2, kind: input, shape index: {}]
  %s3 = inlined_call_operand.vmem [shape: bf16[64,256], index: 3, kind: input, shape index: {}]
  %s4 = inlined_call_operand.hbm [shape: f32[2,64,128], index: 4, kind: output, shape index: {}]
  %s5 = sld [smem:[#allocation0]]
  $region49: #{disc_block_forward.1} parent=0
    _
  %s7 = ssub.s32 1, %s5
  %s8 = scalar_select 0, %s7, %s5
  $region1: #{disc_block_forward.1} parent=0
    #allocation3 [shape = 'u8[65536]{0}', space=vmem, size = 0x10000, scoped, tag = 'output window, operand 0']
    #allocation4 [shape = 's32[2]{0}', space=sflag, size = 0x8, scoped, tag = 'scoped memory for disc_block_forward.1']
    %9 = vsyncpa [#allocation4], 0
    %s10 = scalar_lea.sflag [#allocation4], 1
    %11 = vsyncpa %s10, 0
    loop: start=0, step=1, limit=4
    $region2: #{disc_block_forward.1} parent=1 // loop_pre_header
      _
    $region3: #{disc_block_forward.1} parent=1 // loop_header
      %s13 = sphi 0, %s17
      %p14 = scmp.ge.s32.totalorder %s13, 4
      %s23 = sphi 0, %s25
      %s26 = sphi 0, %s23
      %s27 = sphi 0, %s26
      %s43 = sphi 0, %s27
      %s47 = sphi 0, %s47
      %s49 = sphi 0, %s47
      %s50 = sphi 0, %s49
      %s64 = sphi 0, %s50
      %s68 = sphi 0, %s68
      %s70 = sphi 0, %s68
      %s71 = sphi 0, %s70
      %s85 = sphi 0, %s71
      %s89 = sphi 0, %s89
      %s91 = sphi 0, %s89
      %s92 = sphi 0, %s91
      %s106 = sphi 0, %s92
      %s112 = sphi 0, %s114
      %s115 = sphi 0, %s112
      %s116 = sphi 0, %s115
      %s132 = sphi 0, %s116
    $region4: #{disc_block_forward.1} parent=1 // loop_header_branch
      %16 = sbr.rel (%p14) target = $region8
    $region5: #{disc_block_forward.1} parent=1 // loop_body
      %s18 = ssub.s32 %s13, 1
      %s19 = ssub.s32 %s13, 2
      %s20 = sadd.s32 %s13, 1
      %s21 = ssub.s32 %s13, %s20
      %p22 = scmp.eq.s32.totalorder %s21, 0
      %s24 = sadd.s32 %s23, 1
      %s25 = scalar_select %p22, %s23, %s24
      %p28 = pneg %p22
      %p29 = scmp.eq.s32.totalorder %s13, 1
      %p30 = por %p28, %p29
      %p31 = scmp.ne.s32.totalorder %s23, %s26
      %p32 = scmp.eq.s32.totalorder %s13, 0
      %p33 = por %p31, %p32
      %p34 = scmp.ne.s32.totalorder %s23, %s26
      %p35 = scmp.eq.s32.totalorder %s18, 1
      %p36 = por %p34, %p35
      %p37 = scmp.ne.s32.totalorder %s26, %s27
      %p38 = scmp.eq.s32.totalorder %s18, 0
      %p39 = por %p37, %p38
      %p40 = scmp.ne.s32.totalorder %s26, %s27
      %p41 = scmp.eq.s32.totalorder %s19, 1
      %p42 = por %p40, %p41
      %p44 = scmp.ne.s32.totalorder %s27, %s43
      %p45 = scmp.eq.s32.totalorder %s19, 0
      %p46 = por %p44, %p45
      %s48 = sadd.s32 %s47, 1
      %p51 = scmp.eq.s32.totalorder %s13, 1
      %p52 = scmp.ne.s32.totalorder %s47, %s49
      %p53 = scmp.eq.s32.totalorder %s13, 0
      %p54 = por %p52, %p53
      %p55 = scmp.ne.s32.totalorder %s47, %s49
      %p56 = scmp.eq.s32.totalorder %s18, 1
      %p57 = por %p55, %p56
      %p58 = scmp.ne.s32.totalorder %s49, %s50
      %p59 = scmp.eq.s32.totalorder %s18, 0
      %p60 = por %p58, %p59
      %p61 = scmp.ne.s32.totalorder %s49, %s50
      %p62 = scmp.eq.s32.totalorder %s19, 1
      %p63 = por %p61, %p62
      %p65 = scmp.ne.s32.totalorder %s50, %s64
      %p66 = scmp.eq.s32.totalorder %s19, 0
      %p67 = por %p65, %p66
      %s69 = sadd.s32 %s68, 1
      %p72 = scmp.eq.s32.totalorder %s13, 1
      %p73 = scmp.ne.s32.totalorder %s68, %s70
      %p74 = scmp.eq.s32.totalorder %s13, 0
      %p75 = por %p73, %p74
      %p76 = scmp.ne.s32.totalorder %s68, %s70
      %p77 = scmp.eq.s32.totalorder %s18, 1
      %p78 = por %p76, %p77
      %p79 = scmp.ne.s32.totalorder %s70, %s71
      %p80 = scmp.eq.s32.totalorder %s18, 0
      %p81 = por %p79, %p80
      %p82 = scmp.ne.s32.totalorder %s70, %s71
      %p83 = scmp.eq.s32.totalorder %s19, 1
      %p84 = por %p82, %p83
      %p86 = scmp.ne.s32.totalorder %s71, %s85
      %p87 = scmp.eq.s32.totalorder %s19, 0
      %p88 = por %p86, %p87
      %s90 = sadd.s32 %s89, 1
      %p93 = scmp.eq.s32.totalorder %s13, 1
      %p94 = scmp.ne.s32.totalorder %s89, %s91
      %p95 = scmp.eq.s32.totalorder %s13, 0
      %p96 = por %p94, %p95
      %p97 = scmp.ne.s32.totalorder %s89, %s91
      %p98 = scmp.eq.s32.totalorder %s18, 1
      %p99 = por %p97, %p98
      %p100 = scmp.ne.s32.totalorder %s91, %s92
      %p101 = scmp.eq.s32.totalorder %s18, 0
      %p102 = por %p100, %p101
      %p103 = scmp.ne.s32.totalorder %s91, %s92
      %p104 = scmp.eq.s32.totalorder %s19, 1
      %p105 = por %p103, %p104
      %p107 = scmp.ne.s32.totalorder %s92, %s106
      %p108 = scmp.eq.s32.totalorder %s19, 0
      %p109 = por %p107, %p108
      %s110 = ssub.s32 %s13, %s20
      %p111 = scmp.eq.s32.totalorder %s110, 0
      %s113 = sadd.s32 %s112, 1
      %s114 = scalar_select %p111, %s112, %s113
      %p117 = pneg %p111
      %p118 = scmp.eq.s32.totalorder %s13, 1
      %p119 = por %p117, %p118
      %p120 = scmp.ne.s32.totalorder %s112, %s115
      %p121 = scmp.eq.s32.totalorder %s13, 0
      %p122 = por %p120, %p121
      %p123 = scmp.ne.s32.totalorder %s112, %s115
      %p124 = scmp.eq.s32.totalorder %s18, 1
      %p125 = por %p123, %p124
      %p126 = scmp.ne.s32.totalorder %s115, %s116
      %p127 = scmp.eq.s32.totalorder %s18, 0
      %p128 = por %p126, %p127
      %p129 = scmp.ne.s32.totalorder %s115, %s116
      %p130 = scmp.eq.s32.totalorder %s19, 1
      %p131 = por %p129, %p130
      %p133 = scmp.ne.s32.totalorder %s116, %s132
      %p134 = scmp.eq.s32.totalorder %s19, 0
      %p135 = por %p133, %p134
      %p136 = scmp.le.s32.totalorder 1, %s13
      %p137 = scmp.lt.s32.totalorder %s13, 3
      %p138 = pnand %p136, %p137
      %p139 = pneg %p138
      // Predicated region
      $region9: #{disc_block_forward.1} parent=5 // pred_check
        _
      $region10: #{disc_block_forward.1} parent=5 // pred_check_branch
        %141 = sbr.rel (%p138) target = $region12
      $region11: #{disc_block_forward.1} parent=5 // pred_region
        %s142 = ssub.s32 %s13, 1
        // Predicated region
        $region13: #{disc_block_forward.1} parent=11 // pred_check
          %p143 = pneg %p60
        $region14: #{disc_block_forward.1} parent=11 // pred_check_branch
          %145 = sbr.rel (%p143) target = $region16
        $region15: #{disc_block_forward.1} parent=11 // pred_region
          _
        $region16: #{disc_block_forward.1} parent=11 // pred_fallthru
          _
        // Predicated region
        $region17: #{disc_block_forward.1} parent=11 // pred_check
          %p146 = pneg %p81
        $region18: #{disc_block_forward.1} parent=11 // pred_check_branch
          %148 = sbr.rel (%p146) target = $region20
        $region19: #{disc_block_forward.1} parent=11 // pred_region
          _
        $region20: #{disc_block_forward.1} parent=11 // pred_fallthru
          _
        // Predicated region
        $region21: #{disc_block_forward.1} parent=11 // pred_check
          %p149 = pneg %p102
        $region22: #{disc_block_forward.1} parent=11 // pred_check_branch
          %151 = sbr.rel (%p149) target = $region24
        $region23: #{disc_block_forward.1} parent=11 // pred_region
          _
        $region24: #{disc_block_forward.1} parent=11 // pred_fallthru
          _
      $region12: #{disc_block_forward.1} parent=5 // pred_fallthru
        _
      %p152 = scmp.lt.s32.totalorder %s13, 2
      // Predicated region
      $region25: #{disc_block_forward.1} parent=5 // pred_check
        %p153 = pneg %p152
      $region26: #{disc_block_forward.1} parent=5 // pred_check_branch
        %155 = sbr.rel (%p153) target = $region28
      $region27: #{disc_block_forward.1} parent=5 // pred_region
        // Predicated region
        $region29: #{disc_block_forward.1} parent=27 // pred_check
          %p156 = pneg %p33
        $region30: #{disc_block_forward.1} parent=27 // pred_check_branch
          %158 = sbr.rel (%p156) target = $region32
        $region31: #{disc_block_forward.1} parent=27 // pred_region
          %p159 = scmp.lt.s32.totalorder %s13, 1
          %s160 = scalar_select %p159, %s13, 1
          %s161 = smul.addr %s160, 54
          %s162 = smul.addr %s161, 8
          %s163 = scalar_lea.vmem %s0, %s162
        $region32: #{disc_block_forward.1} parent=27 // pred_fallthru
          _
      $region28: #{disc_block_forward.1} parent=5 // pred_fallthru
        _
      %p164 = scmp.le.s32.totalorder 1, %s13
      %p165 = scmp.lt.s32.totalorder %s13, 3
      %p166 = pnand %p164, %p165
      %p167 = pneg %p166
      // Predicated region
      $region33: #{disc_block_forward.1} parent=5 // pred_check
        _
      $region34: #{disc_block_forward.1} parent=5 // pred_check_branch
        %169 = sbr.rel (%p166) target = $region36
      $region35: #{disc_block_forward.1} parent=5 // pred_region
        %s170 = ssub.s32 %s13, 1
        %p171 = scmp.lt.s32.totalorder %s18, 1
        %s172 = scalar_select %p171, %s18, 1
        %s173 = smul.addr %s172, 54
        %s174 = smul.addr %s173, 8
        %s175 = scalar_lea.vmem %s0, %s174
        %p176 = pneg %p39
        %p177 = pneg %p36
        %p178 = pneg %p60
        %p179 = pneg %p57
        %p180 = pneg %p81
        %p181 = pneg %p78
        %p182 = pneg %p102
        %p183 = pneg %p99
        %p184 = pneg %p128
        %p185 = pneg %p125
        %s186 = sand.u32 %s115, 1
        %s187 = scalar_lea.sflag [#allocation4], %s186
        %s188 = sand.u32 %s115, 1
        %s189 = smul.addr %s188, 64
        %s190 = scalar_lea.vmem [#allocation3], %s189
        %p191 = scmp.lt.s32.totalorder %s18, 1
        %s192 = scalar_select %p191, %s18, 1
        %s193 = smul.addr %s192, 54
        %s194 = smul.addr %s193, 8
        %s195 = scalar_lea.vmem %s0, %s194
        %v197 = vld [vmem:[%s195] sm:$0xff]
        %v198 = vld [vmem:[%s195 + $0x8] sm:$0xff]
        %v199 = vld [vmem:[%s195 + $0x10] sm:$0x3]
        %v200 = vld [vmem:[%s195 + $0x18] sm:$0xff]
        %v201 = vld [vmem:[%s195 + $0x20] sm:$0xff]
        %v202 = vld [vmem:[%s195 + $0x28] sm:$0x3]
        %v203 = vld [vmem:[%s195 + $0x30] sm:$0xff]
        %v204 = vld [vmem:[%s195 + $0x38] sm:$0xff]
        %v205 = vld [vmem:[%s195 + $0x40] sm:$0x3]
        %v206 = vld [vmem:[%s195 + $0x48] sm:$0xff]
        %v207 = vld [vmem:[%s195 + $0x50] sm:$0xff]
        %v208 = vld [vmem:[%s195 + $0x58] sm:$0x3]
        %v209 = vld [vmem:[%s195 + $0x60] sm:$0xff]
        %v210 = vld [vmem:[%s195 + $0x68] sm:$0xff]
        %v211 = vld [vmem:[%s195 + $0x70] sm:$0x3]
        %v212 = vld [vmem:[%s195 + $0x78] sm:$0xff]
        %v213 = vld [vmem:[%s195 + $0x80] sm:$0xff]
        %v214 = vld [vmem:[%s195 + $0x88] sm:$0x3]
        %v215 = vld [vmem:[%s195 + $0x90] sm:$0xff]
        %v216 = vld [vmem:[%s195 + $0x98] sm:$0xff]
        %v217 = vld [vmem:[%s195 + $0xa0] sm:$0x3]
        %v218 = vld [vmem:[%s195 + $0xa8] sm:$0xff]
        %v219 = vld [vmem:[%s195 + $0xb0] sm:$0xff]
        %v220 = vld [vmem:[%s195 + $0xb8] sm:$0x3]
        %v221 = vld [vmem:[%s195 + $0xc0] sm:$0xff]
        %v222 = vld [vmem:[%s195 + $0xc8] sm:$0xff]
        %v223 = vld [vmem:[%s195 + $0xd0] sm:$0x3]
        %v224 = vld [vmem:[%s195 + $0xd8] sm:$0xff]
        %v225 = vld [vmem:[%s195 + $0xe0] sm:$0xff]
        %v226 = vld [vmem:[%s195 + $0xe8] sm:$0x3]
        %v227 = vld [vmem:[%s195 + $0xf0] sm:$0xff]
        %v228 = vld [vmem:[%s195 + $0xf8] sm:$0xff]
        %v229 = vld [vmem:[%s195 + $0x100] sm:$0x3]
        %v230 = vld [vmem:[%s195 + $0x108] sm:$0xff]
        %v231 = vld [vmem:[%s195 + $0x110] sm:$0xff]
        %v232 = vld [vmem:[%s195 + $0x118] sm:$0x3]
        %v233 = vld [vmem:[%s195 + $0x120] sm:$0xff]
        %v234 = vld [vmem:[%s195 + $0x128] sm:$0xff]
        %v235 = vld [vmem:[%s195 + $0x130] sm:$0x3]
        %v236 = vld [vmem:[%s195 + $0x138] sm:$0xff]
        %v237 = vld [vmem:[%s195 + $0x140] sm:$0xff]
        %v238 = vld [vmem:[%s195 + $0x148] sm:$0x3]
        %v239 = vld [vmem:[%s195 + $0x150] sm:$0xff]
        %v240 = vld [vmem:[%s195 + $0x158] sm:$0xff]
        %v241 = vld [vmem:[%s195 + $0x160] sm:$0x3]
        %v242 = vld [vmem:[%s195 + $0x168] sm:$0xff]
        %v243 = vld [vmem:[%s195 + $0x170] sm:$0xff]
        %v244 = vld [vmem:[%s195 + $0x178] sm:$0x3]
        %v245 = vld [vmem:[%s195 + $0x180] sm:$0xff]
        %v246 = vld [vmem:[%s195 + $0x188] sm:$0xff]
        %v247 = vld [vmem:[%s195 + $0x190] sm:$0x3]
        %v248 = vld [vmem:[%s195 + $0x198] sm:$0xff]
        %v249 = vld [vmem:[%s195 + $0x1a0] sm:$0xff]
        %v250 = vld [vmem:[%s195 + $0x1a8] sm:$0x3]
        %v251 = vmul.f32 %v197, 0.2
        %v252 = vmul.f32 %v198, 0.2
        %v253 = vmul.f32 %v199, 0.2
        %v254 = vmul.f32 %v200, 0.2
        %v255 = vmul.f32 %v201, 0.2
        %v256 = vmul.f32 %v202, 0.2
        %v257 = vmul.f32 %v203, 0.2
        %v258 = vmul.f32 %v204, 0.2
        %v259 = vmul.f32 %v205, 0.2
        %v260 = vmul.f32 %v206, 0.2
        %v261 = vmul.f32 %v207, 0.2
        %v262 = vmul.f32 %v208, 0.2
        %v263 = vmul.f32 %v209, 0.2
        %v264 = vmul.f32 %v210, 0.2
        %v265 = vmul.f32 %v211, 0.2
        %v266 = vmul.f32 %v212, 0.2
        %v267 = vmul.f32 %v213, 0.2
        %v268 = vmul.f32 %v214, 0.2
        %v269 = vmul.f32 %v215, 0.2
        %v270 = vmul.f32 %v216, 0.2
        %v271 = vmul.f32 %v217, 0.2
        %v272 = vmul.f32 %v218, 0.2
        %v273 = vmul.f32 %v219, 0.2
        %v274 = vmul.f32 %v220, 0.2
        %v275 = vmul.f32 %v221, 0.2
        %v276 = vmul.f32 %v222, 0.2
        %v277 = vmul.f32 %v223, 0.2
        %v278 = vmul.f32 %v224, 0.2
        %v279 = vmul.f32 %v225, 0.2
        %v280 = vmul.f32 %v226, 0.2
        %v281 = vmul.f32 %v227, 0.2
        %v282 = vmul.f32 %v228, 0.2
        %v283 = vmul.f32 %v229, 0.2
        %v284 = vmul.f32 %v230, 0.2
        %v285 = vmul.f32 %v231, 0.2
        %v286 = vmul.f32 %v232, 0.2
        %v287 = vmul.f32 %v233, 0.2
        %v288 = vmul.f32 %v234, 0.2
        %v289 = vmul.f32 %v235, 0.2
        %v290 = vmul.f32 %v236, 0.2
        %v291 = vmul.f32 %v237, 0.2
        %v292 = vmul.f32 %v238, 0.2
        %v293 = vmul.f32 %v239, 0.2
        %v294 = vmul.f32 %v240, 0.2
        %v295 = vmul.f32 %v241, 0.2
        %v296 = vmul.f32 %v242, 0.2
        %v297 = vmul.f32 %v243, 0.2
        %v298 = vmul.f32 %v244, 0.2
        %v299 = vmul.f32 %v245, 0.2
        %v300 = vmul.f32 %v246, 0.2
        %v301 = vmul.f32 %v247, 0.2
        %v302 = vmul.f32 %v248, 0.2
        %v303 = vmul.f32 %v249, 0.2
        %v304 = vmul.f32 %v250, 0.2
        %v305 = vmax.f32 %v197, %v251
        %v306 = vmax.f32 %v198, %v252
        %v307 = vmax.f32 %v199, %v253
        %v308 = vmax.f32 %v200, %v254
        %v309 = vmax.f32 %v201, %v255
        %v310 = vmax.f32 %v202, %v256
        %v311 = vmax.f32 %v203, %v257
        %v312 = vmax.f32 %v204, %v258
        %v313 = vmax.f32 %v205, %v259
        %v314 = vmax.f32 %v206, %v260
        %v315 = vmax.f32 %v207, %v261
        %v316 = vmax.f32 %v208, %v262
        %v317 = vmax.f32 %v209, %v263
        %v318 = vmax.f32 %v210, %v264
        %v319 = vmax.f32 %v211, %v265
        %v320 = vmax.f32 %v212, %v266
        %v321 = vmax.f32 %v213, %v267
        %v322 = vmax.f32 %v214, %v268
        %v323 = vmax.f32 %v215, %v269
        %v324 = vmax.f32 %v216, %v270
        %v325 = vmax.f32 %v217, %v271
        %v326 = vmax.f32 %v218, %v272
        %v327 = vmax.f32 %v219, %v273
        %v328 = vmax.f32 %v220, %v274
        %v329 = vmax.f32 %v221, %v275
        %v330 = vmax.f32 %v222, %v276
        %v331 = vmax.f32 %v223, %v277
        %v332 = vmax.f32 %v224, %v278
        %v333 = vmax.f32 %v225, %v279
        %v334 = vmax.f32 %v226, %v280
        %v335 = vmax.f32 %v227, %v281
        %v336 = vmax.f32 %v228, %v282
        %v337 = vmax.f32 %v229, %v283
        %v338 = vmax.f32 %v230, %v284
        %v339 = vmax.f32 %v231, %v285
        %v340 = vmax.f32 %v232, %v286
        %v341 = vmax.f32 %v233, %v287
        %v342 = vmax.f32 %v234, %v288
        %v343 = vmax.f32 %v235, %v289
        %v344 = vmax.f32 %v236, %v290
        %v345 = vmax.f32 %v237, %v291
        %v346 = vmax.f32 %v238, %v292
        %v347 = vmax.f32 %v239, %v293
        %v348 = vmax.f32 %v240, %v294
        %v349 = vmax.f32 %v241, %v295
        %v350 = vmax.f32 %v242, %v296
        %v351 = vmax.f32 %v243, %v297
        %v352 = vmax.f32 %v244, %v298
        %v353 = vmax.f32 %v245, %v299
        %v354 = vmax.f32 %v246, %v300
        %v355 = vmax.f32 %v247, %v301
        %v356 = vmax.f32 %v248, %v302
        %v357 = vmax.f32 %v249, %v303
        %v358 = vmax.f32 %v250, %v304
        %vm407 = vcmask 1046528
        %v408 = vrot.slane %v305, 1
        %v409 = vrot.slane %v306, 1
        %v410 = vsel %vm407, %v408, %v409
        %v411 = vrot.slane %v307, 1
        %v412 = vsel %vm407, %v409, %v411
        %v413 = vrot.slane %v308, 1
        %v414 = vrot.slane %v309, 1
        %v415 = vsel %vm407, %v413, %v414
        %v416 = vrot.slane %v310, 1
        %v417 = vsel %vm407, %v414, %v416
        %v418 = vrot.slane %v311, 1
        %v419 = vrot.slane %v312, 1
        %v420 = vsel %vm407, %v418, %v419
        %v421 = vrot.slane %v313, 1
        %v422 = vsel %vm407, %v419, %v421
        %v423 = vrot.slane %v314, 1
        %v424 = vrot.slane %v315, 1
        %v425 = vsel %vm407, %v423, %v424
        %v426 = vrot.slane %v316, 1
        %v427 = vsel %vm407, %v424, %v426
        %v428 = vrot.slane %v317, 1
        %v429 = vrot.slane %v318, 1
        %v430 = vsel %vm407, %v428, %v429
        %v431 = vrot.slane %v319, 1
        %v432 = vsel %vm407, %v429, %v431
        %v433 = vrot.slane %v320, 1
        %v434 = vrot.slane %v321, 1
        %v435 = vsel %vm407, %v433, %v434
        %v436 = vrot.slane %v322, 1
        %v437 = vsel %vm407, %v434, %v436
        %v438 = vrot.slane %v323, 1
        %v439 = vrot.slane %v324, 1
        %v440 = vsel %vm407, %v438, %v439
        %v441 = vrot.slane %v325, 1
        %v442 = vsel %vm407, %v439, %v441
        %v443 = vrot.slane %v326, 1
        %v444 = vrot.slane %v327, 1
        %v445 = vsel %vm407, %v443, %v444
        %v446 = vrot.slane %v328, 1
        %v447 = vsel %vm407, %v444, %v446
        %v448 = vrot.slane %v329, 1
        %v449 = vrot.slane %v330, 1
        %v450 = vsel %vm407, %v448, %v449
        %v451 = vrot.slane %v331, 1
        %v452 = vsel %vm407, %v449, %v451
        %v453 = vrot.slane %v332, 1
        %v454 = vrot.slane %v333, 1
        %v455 = vsel %vm407, %v453, %v454
        %v456 = vrot.slane %v334, 1
        %v457 = vsel %vm407, %v454, %v456
        %v458 = vrot.slane %v335, 1
        %v459 = vrot.slane %v336, 1
        %v460 = vsel %vm407, %v458, %v459
        %v461 = vrot.slane %v337, 1
        %v462 = vsel %vm407, %v459, %v461
        %v463 = vrot.slane %v338, 1
        %v464 = vrot.slane %v339, 1
        %v465 = vsel %vm407, %v463, %v464
        %v466 = vrot.slane %v340, 1
        %v467 = vsel %vm407, %v464, %v466
        %v468 = vrot.slane %v341, 1
        %v469 = vrot.slane %v342, 1
        %v470 = vsel %vm407, %v468, %v469
        %v471 = vrot.slane %v343, 1
        %v472 = vsel %vm407, %v469, %v471
        %v473 = vrot.slane %v344, 1
        %v474 = vrot.slane %v345, 1
        %v475 = vsel %vm407, %v473, %v474
        %v476 = vrot.slane %v346, 1
        %v477 = vsel %vm407, %v474, %v476
        %v478 = vrot.slane %v347, 1
        %v479 = vrot.slane %v348, 1
        %v480 = vsel %vm407, %v478, %v479
        %v481 = vrot.slane %v349, 1
        %v482 = vsel %vm407, %v479, %v481
        %v483 = vrot.slane %v350, 1
        %v484 = vrot.slane %v351, 1
        %v485 = vsel %vm407, %v483, %v484
        %v486 = vrot.slane %v352, 1
        %v487 = vsel %vm407, %v484, %v486
        %vm488 = vcmask 1045504
        %v489 = vrot.slane %v305, 2
        %v490 = vrot.slane %v306, 2
        %v491 = vsel %vm488, %v489, %v490
        %v492 = vrot.slane %v307, 2
        %v493 = vsel %vm488, %v490, %v492
        %v494 = vrot.slane %v308, 2
        %v495 = vrot.slane %v309, 2
        %v496 = vsel %vm488, %v494, %v495
        %v497 = vrot.slane %v310, 2
        %v498 = vsel %vm488, %v495, %v497
        %v499 = vrot.slane %v311, 2
        %v500 = vrot.slane %v312, 2
        %v501 = vsel %vm488, %v499, %v500
        %v502 = vrot.slane %v313, 2
        %v503 = vsel %vm488, %v500, %v502
        %v504 = vrot.slane %v314, 2
        %v505 = vrot.slane %v315, 2
        %v506 = vsel %vm488, %v504, %v505
        %v507 = vrot.slane %v316, 2
        %v508 = vsel %vm488, %v505, %v507
        %v509 = vrot.slane %v317, 2
        %v510 = vrot.slane %v318, 2
        %v511 = vsel %vm488, %v509, %v510
        %v512 = vrot.slane %v319, 2
        %v513 = vsel %vm488, %v510, %v512
        %v514 = vrot.slane %v320, 2
        %v515 = vrot.slane %v321, 2
        %v516 = vsel %vm488, %v514, %v515
        %v517 = vrot.slane %v322, 2
        %v518 = vsel %vm488, %v515, %v517
        %v519 = vrot.slane %v323, 2
        %v520 = vrot.slane %v324, 2
        %v521 = vsel %vm488, %v519, %v520
        %v522 = vrot.slane %v325, 2
        %v523 = vsel %vm488, %v520, %v522
        %v524 = vrot.slane %v326, 2
        %v525 = vrot.slane %v327, 2
        %v526 = vsel %vm488, %v524, %v525
        %v527 = vrot.slane %v328, 2
        %v528 = vsel %vm488, %v525, %v527
        %v529 = vrot.slane %v329, 2
        %v530 = vrot.slane %v330, 2
        %v531 = vsel %vm488, %v529, %v530
        %v532 = vrot.slane %v331, 2
        %v533 = vsel %vm488, %v530, %v532
        %v534 = vrot.slane %v332, 2
        %v535 = vrot.slane %v333, 2
        %v536 = vsel %vm488, %v534, %v535
        %v537 = vrot.slane %v334, 2
        %v538 = vsel %vm488, %v535, %v537
        %v539 = vrot.slane %v335, 2
        %v540 = vrot.slane %v336, 2
        %v541 = vsel %vm488, %v539, %v540
        %v542 = vrot.slane %v337, 2
        %v543 = vsel %vm488, %v540, %v542
        %v544 = vrot.slane %v338, 2
        %v545 = vrot.slane %v339, 2
        %v546 = vsel %vm488, %v544, %v545
        %v547 = vrot.slane %v340, 2
        %v548 = vsel %vm488, %v545, %v547
        %v549 = vrot.slane %v341, 2
        %v550 = vrot.slane %v342, 2
        %v551 = vsel %vm488, %v549, %v550
        %v552 = vrot.slane %v343, 2
        %v553 = vsel %vm488, %v550, %v552
        %v554 = vrot.slane %v344, 2
        %v555 = vrot.slane %v345, 2
        %v556 = vsel %vm488, %v554, %v555
        %v557 = vrot.slane %v346, 2
        %v558 = vsel %vm488, %v555, %v557
        %v559 = vrot.slane %v347, 2
        %v560 = vrot.slane %v348, 2
        %v561 = vsel %vm488, %v559, %v560
        %v562 = vrot.slane %v349, 2
        %v563 = vsel %vm488, %v560, %v562
        %v564 = vrot.slane %v350, 2
        %v565 = vrot.slane %v351, 2
        %v566 = vsel %vm488, %v564, %v565
        %v567 = vrot.slane %v352, 2
        %v568 = vsel %vm488, %v565, %v567
        %v604 = vrot.slane %v353, 1
        %v605 = vrot.slane %v354, 1
        %v606 = vsel %vm407, %v604, %v605
        %v607 = vrot.slane %v355, 1
        %v608 = vsel %vm407, %v605, %v607
        %v641 = vrot.slane %v353, 2
        %v642 = vrot.slane %v354, 2
        %v643 = vsel %vm488, %v641, %v642
        %v644 = vrot.slane %v355, 2
        %v645 = vsel %vm488, %v642, %v644
        %v649 = vrot.slane %v356, 1
        %v650 = vrot.slane %v357, 1
        %v651 = vsel %vm407, %v649, %v650
        %v652 = vrot.slane %v358, 1
        %v653 = vsel %vm407, %v650, %v652
        %v654 = vrot.slane %v356, 2
        %v655 = vrot.slane %v357, 2
        %v656 = vsel %vm488, %v654, %v655
        %v657 = vrot.slane %v358, 2
        %v658 = vsel %vm488, %v655, %v657
        %vm663 = vcmp.ge.f32.partialorder %v415, 0.0
        %vm664 = vcmp.ge.f32.partialorder %v417, 0.0
        %vm665 = vcmp.ge.f32.partialorder %v420, 0.0
        %vm666 = vcmp.ge.f32.partialorder %v422, 0.0
        %vm667 = vcmp.ge.f32.partialorder %v425, 0.0
        %vm668 = vcmp.ge.f32.partialorder %v427, 0.0
        %vm669 = vcmp.ge.f32.partialorder %v430, 0.0
        %vm670 = vcmp.ge.f32.partialorder %v432, 0.0
        %vm671 = vcmp.ge.f32.partialorder %v435, 0.0
        %vm672 = vcmp.ge.f32.partialorder %v437, 0.0
        %vm673 = vcmp.ge.f32.partialorder %v440, 0.0
        %vm674 = vcmp.ge.f32.partialorder %v442, 0.0
        %vm675 = vcmp.ge.f32.partialorder %v445, 0.0
        %vm676 = vcmp.ge.f32.partialorder %v447, 0.0
        %vm677 = vcmp.ge.f32.partialorder %v450, 0.0
        %vm678 = vcmp.ge.f32.partialorder %v452, 0.0
        %vm679 = vcmp.ge.f32.partialorder %v455, 0.0
        %vm680 = vcmp.ge.f32.partialorder %v457, 0.0
        %vm681 = vcmp.ge.f32.partialorder %v460, 0.0
        %vm682 = vcmp.ge.f32.partialorder %v462, 0.0
        %vm683 = vcmp.ge.f32.partialorder %v465, 0.0
        %vm684 = vcmp.ge.f32.partialorder %v467, 0.0
        %vm685 = vcmp.ge.f32.partialorder %v470, 0.0
        %vm686 = vcmp.ge.f32.partialorder %v472, 0.0
        %vm687 = vcmp.ge.f32.partialorder %v475, 0.0
        %vm688 = vcmp.ge.f32.partialorder %v477, 0.0
        %vm689 = vcmp.ge.f32.partialorder %v480, 0.0
        %vm690 = vcmp.ge.f32.partialorder %v482, 0.0
        %vm691 = vcmp.ge.f32.partialorder %v485, 0.0
        %vm692 = vcmp.ge.f32.partialorder %v487, 0.0
        %vm693 = vcmp.ge.f32.partialorder %v606, 0.0
        %vm694 = vcmp.ge.f32.partialorder %v608, 0.0
        %v695 = vmul.f32 %v415, 5.0
        %v696 = vmul.f32 %v417, 5.0
        %v697 = vmul.f32 %v420, 5.0
        %v698 = vmul.f32 %v422, 5.0
        %v699 = vmul.f32 %v425, 5.0
        %v700 = vmul.f32 %v427, 5.0
        %v701 = vmul.f32 %v430, 5.0
        %v702 = vmul.f32 %v432, 5.0
        %v703 = vmul.f32 %v435, 5.0
        %v704 = vmul.f32 %v437, 5.0
        %v705 = vmul.f32 %v440, 5.0
        %v706 = vmul.f32 %v442, 5.0
        %v707 = vmul.f32 %v445, 5.0
        %v708 = vmul.f32 %v447, 5.0
        %v709 = vmul.f32 %v450, 5.0
        %v710 = vmul.f32 %v452, 5.0
        %v711 = vmul.f32 %v455, 5.0
        %v712 = vmul.f32 %v457, 5.0
        %v713 = vmul.f32 %v460, 5.0
        %v714 = vmul.f32 %v462, 5.0
        %v715 = vmul.f32 %v465, 5.0
        %v716 = vmul.f32 %v467, 5.0
        %v717 = vmul.f32 %v470, 5.0
        %v718 = vmul.f32 %v472, 5.0
        %v719 = vmul.f32 %v475, 5.0
        %v720 = vmul.f32 %v477, 5.0
        %v721 = vmul.f32 %v480, 5.0
        %v722 = vmul.f32 %v482, 5.0
        %v723 = vmul.f32 %v485, 5.0
        %v724 = vmul.f32 %v487, 5.0
        %v725 = vmul.f32 %v606, 5.0
        %v726 = vmul.f32 %v608, 5.0
        %v727 = vsel %vm663, %v415, %v695
        %v728 = vsel %vm664, %v417, %v696
        %v729 = vsel %vm665, %v420, %v697
        %v730 = vsel %vm666, %v422, %v698
        %v731 = vsel %vm667, %v425, %v699
        %v732 = vsel %vm668, %v427, %v700
        %v733 = vsel %vm669, %v430, %v701
        %v734 = vsel %vm670, %v432, %v702
        %v735 = vsel %vm671, %v435, %v703
        %v736 = vsel %vm672, %v437, %v704
        %v737 = vsel %vm673, %v440, %v705
        %v738 = vsel %vm674, %v442, %v706
        %v739 = vsel %vm675, %v445, %v707
        %v740 = vsel %vm676, %v447, %v708
        %v741 = vsel %vm677, %v450, %v709
        %v742 = vsel %vm678, %v452, %v710
        %v743 = vsel %vm679, %v455, %v711
        %v744 = vsel %vm680, %v457, %v712
        %v745 = vsel %vm681, %v460, %v713
        %v746 = vsel %vm682, %v462, %v714
        %v747 = vsel %vm683, %v465, %v715
        %v748 = vsel %vm684, %v467, %v716
        %v749 = vsel %vm685, %v470, %v717
        %v750 = vsel %vm686, %v472, %v718
        %v751 = vsel %vm687, %v475, %v719
        %v752 = vsel %vm688, %v477, %v720
        %v753 = vsel %vm689, %v480, %v721
        %v754 = vsel %vm690, %v482, %v722
        %v755 = vsel %vm691, %v485, %v723
        %v756 = vsel %vm692, %v487, %v724
        %v757 = vsel %vm693, %v606, %v725
        %v758 = vsel %vm694, %v608, %v726
        %759 = vrot.lane.b32.xlu0 %v410, 64
        %v760 = vpop.permute.xlu0 %759
        %761 = vrot.lane.b32.xlu0 %v412, 64
        %v762 = vpop.permute.xlu0 %761
        %763 = vrot.lane.b32.xlu0 %v415, 64
        %v764 = vpop.permute.xlu0 %763
        %765 = vrot.lane.b32.xlu0 %v417, 64
        %v766 = vpop.permute.xlu0 %765
        %767 = vrot.lane.b32.xlu0 %v420, 64
        %v768 = vpop.permute.xlu0 %767
        %769 = vrot.lane.b32.xlu0 %v422, 64
        %v770 = vpop.permute.xlu0 %769
        %771 = vrot.lane.b32.xlu0 %v425, 64
        %v772 = vpop.permute.xlu0 %771
        %773 = vrot.lane.b32.xlu0 %v427, 64
        %v774 = vpop.permute.xlu0 %773
        %775 = vrot.lane.b32.xlu0 %v430, 64
        %v776 = vpop.permute.xlu0 %775
        %777 = vrot.lane.b32.xlu0 %v432, 64
        %v778 = vpop.permute.xlu0 %777
        %779 = vrot.lane.b32.xlu0 %v435, 64
        %v780 = vpop.permute.xlu0 %779
        %781 = vrot.lane.b32.xlu0 %v437, 64
        %v782 = vpop.permute.xlu0 %781
        %783 = vrot.lane.b32.xlu0 %v440, 64
        %v784 = vpop.permute.xlu0 %783
        %785 = vrot.lane.b32.xlu0 %v442, 64
        %v786 = vpop.permute.xlu0 %785
        %787 = vrot.lane.b32.xlu0 %v445, 64
        %v788 = vpop.permute.xlu0 %787
        %789 = vrot.lane.b32.xlu0 %v447, 64
        %v790 = vpop.permute.xlu0 %789
        %791 = vrot.lane.b32.xlu0 %v450, 64
        %v792 = vpop.permute.xlu0 %791
        %793 = vrot.lane.b32.xlu0 %v452, 64
        %v794 = vpop.permute.xlu0 %793
        %795 = vrot.lane.b32.xlu0 %v455, 64
        %v796 = vpop.permute.xlu0 %795
        %797 = vrot.lane.b32.xlu0 %v457, 64
        %v798 = vpop.permute.xlu0 %797
        %799 = vrot.lane.b32.xlu0 %v460, 64
        %v800 = vpop.permute.xlu0 %799
        %801 = vrot.lane.b32.xlu0 %v462, 64
        %v802 = vpop.permute.xlu0 %801
        %803 = vrot.lane.b32.xlu0 %v465, 64
        %v804 = vpop.permute.xlu0 %803
        %805 = vrot.lane.b32.xlu0 %v467, 64
        %v806 = vpop.permute.xlu0 %805
        %807 = vrot.lane.b32.xlu0 %v470, 64
        %v808 = vpop.permute.xlu0 %807
        %809 = vrot.lane.b32.xlu0 %v472, 64
        %v810 = vpop.permute.xlu0 %809
        %811 = vrot.lane.b32.xlu0 %v475, 64
        %v812 = vpop.permute.xlu0 %811
        %813 = vrot.lane.b32.xlu0 %v477, 64
        %v814 = vpop.permute.xlu0 %813
        %815 = vrot.lane.b32.xlu0 %v480, 64
        %v816 = vpop.permute.xlu0 %815
        %817 = vrot.lane.b32.xlu0 %v482, 64
        %v818 = vpop.permute.xlu0 %817
        %819 = vrot.lane.b32.xlu0 %v485, 64
        %v820 = vpop.permute.xlu0 %819
        %821 = vrot.lane.b32.xlu0 %v487, 64
        %v822 = vpop.permute.xlu0 %821
        %vm855 = vcmask 523264
        %v856 = vsel %vm855, %v305, %v760
        %v857 = vsel %vm855, %v306, %v762
        %v858 = vsel %vm855, %v308, %v764
        %v859 = vsel %vm855, %v309, %v766
        %v860 = vsel %vm855, %v311, %v768
        %v861 = vsel %vm855, %v312, %v770
        %v862 = vsel %vm855, %v314, %v772
        %v863 = vsel %vm855, %v315, %v774
        %v864 = vsel %vm855, %v317, %v776
        %v865 = vsel %vm855, %v318, %v778
        %v866 = vsel %vm855, %v320, %v780
        %v867 = vsel %vm855, %v321, %v782
        %v868 = vsel %vm855, %v323, %v784
        %v869 = vsel %vm855, %v324, %v786
        %v870 = vsel %vm855, %v326, %v788
        %v871 = vsel %vm855, %v327, %v790
        %v872 = vsel %vm855, %v329, %v792
        %v873 = vsel %vm855, %v330, %v794
        %v874 = vsel %vm855, %v332, %v796
        %v875 = vsel %vm855, %v333, %v798
        %v876 = vsel %vm855, %v335, %v800
        %v877 = vsel %vm855, %v336, %v802
        %v878 = vsel %vm855, %v338, %v804
        %v879 = vsel %vm855, %v339, %v806
        %v880 = vsel %vm855, %v341, %v808
        %v881 = vsel %vm855, %v342, %v810
        %v882 = vsel %vm855, %v344, %v812
        %v883 = vsel %vm855, %v345, %v814
        %v884 = vsel %vm855, %v347, %v816
        %v885 = vsel %vm855, %v348, %v818
        %v886 = vsel %vm855, %v350, %v820
        %v887 = vsel %vm855, %v351, %v822
        %v888 = vpack.c.bf16 %v857, %v856
        %v889 = vpack.c.bf16 %v859, %v858
        %v890 = vpack.c.bf16 %v861, %v860
        %v891 = vpack.c.bf16 %v863, %v862
        %v892 = vpack.c.bf16 %v865, %v864
        %v893 = vpack.c.bf16 %v867, %v866
        %v894 = vpack.c.bf16 %v869, %v868
        %v895 = vpack.c.bf16 %v871, %v870
        %v896 = vpack.c.bf16 %v873, %v872
        %v897 = vpack.c.bf16 %v875, %v874
        %v898 = vpack.c.bf16 %v877, %v876
        %v899 = vpack.c.bf16 %v879, %v878
        %v900 = vpack.c.bf16 %v881, %v880
        %v901 = vpack.c.bf16 %v883, %v882
        %v902 = vpack.c.bf16 %v885, %v884
        %v903 = vpack.c.bf16 %v887, %v886
        %904 = vst [vmem:[#allocation2] sm:$0xff] %v888
        %905 = vst [vmem:[#allocation2 + $0x28] sm:$0xff] %v889
        %906 = vst [vmem:[#allocation2 + $0x50] sm:$0xff] %v890
        %907 = vst [vmem:[#allocation2 + $0x78] sm:$0xff] %v891
        %908 = vst [vmem:[#allocation2 + $0xa0] sm:$0xff] %v892
        %909 = vst [vmem:[#allocation2 + $0xc8] sm:$0xff] %v893
        %910 = vst [vmem:[#allocation2 + $0xf0] sm:$0xff] %v894
        %911 = vst [vmem:[#allocation2 + $0x118] sm:$0xff] %v895
        %912 = vst [vmem:[#allocation2 + $0x140] sm:$0xff] %v896
        %913 = vst [vmem:[#allocation2 + $0x168] sm:$0xff] %v897
        %914 = vst [vmem:[#allocation2 + $0x190] sm:$0xff] %v898
        %915 = vst [vmem:[#allocation2 + $0x1b8] sm:$0xff] %v899
        %916 = vst [vmem:[#allocation2 + $0x1e0] sm:$0xff] %v900
        %917 = vst [vmem:[#allocation2 + $0x208] sm:$0xff] %v901
        %918 = vst [vmem:[#allocation2 + $0x230] sm:$0xff] %v902
        %919 = vst [vmem:[#allocation2 + $0x258] sm:$0xff] %v903
        %920 = vrot.lane.b32.xlu0 %v308, 64
        %v921 = vpop.permute.xlu0 %920
        %922 = vrot.lane.b32.xlu0 %v309, 64
        %v923 = vpop.permute.xlu0 %922
        %924 = vrot.lane.b32.xlu0 %v311, 64
        %v925 = vpop.permute.xlu0 %924
        %926 = vrot.lane.b32.xlu0 %v312, 64
        %v927 = vpop.permute.xlu0 %926
        %928 = vrot.lane.b32.xlu0 %v314, 64
        %v929 = vpop.permute.xlu0 %928
        %930 = vrot.lane.b32.xlu0 %v315, 64
        %v931 = vpop.permute.xlu0 %930
        %932 = vrot.lane.b32.xlu0 %v317, 64
        %v933 = vpop.permute.xlu0 %932
        %934 = vrot.lane.b32.xlu0 %v318, 64
        %v935 = vpop.permute.xlu0 %934
        %936 = vrot.lane.b32.xlu0 %v320, 64
        %v937 = vpop.permute.xlu0 %936
        %938 = vrot.lane.b32.xlu0 %v321, 64
        %v939 = vpop.permute.xlu0 %938
        %940 = vrot.lane.b32.xlu0 %v323, 64
        %v941 = vpop.permute.xlu0 %940
        %942 = vrot.lane.b32.xlu0 %v324, 64
        %v943 = vpop.permute.xlu0 %942
        %944 = vrot.lane.b32.xlu0 %v326, 64
        %v945 = vpop.permute.xlu0 %944
        %946 = vrot.lane.b32.xlu0 %v327, 64
        %v947 = vpop.permute.xlu0 %946
        %948 = vrot.lane.b32.xlu0 %v329, 64
        %v949 = vpop.permute.xlu0 %948
        %950 = vrot.lane.b32.xlu0 %v330, 64
        %v951 = vpop.permute.xlu0 %950
        %952 = vrot.lane.b32.xlu0 %v332, 64
        %v953 = vpop.permute.xlu0 %952
        %954 = vrot.lane.b32.xlu0 %v333, 64
        %v955 = vpop.permute.xlu0 %954
        %956 = vrot.lane.b32.xlu0 %v335, 64
        %v957 = vpop.permute.xlu0 %956
        %958 = vrot.lane.b32.xlu0 %v336, 64
        %v959 = vpop.permute.xlu0 %958
        %960 = vrot.lane.b32.xlu0 %v338, 64
        %v961 = vpop.permute.xlu0 %960
        %962 = vrot.lane.b32.xlu0 %v339, 64
        %v963 = vpop.permute.xlu0 %962
        %964 = vrot.lane.b32.xlu0 %v341, 64
        %v965 = vpop.permute.xlu0 %964
        %966 = vrot.lane.b32.xlu0 %v342, 64
        %v967 = vpop.permute.xlu0 %966
        %968 = vrot.lane.b32.xlu0 %v344, 64
        %v969 = vpop.permute.xlu0 %968
        %970 = vrot.lane.b32.xlu0 %v345, 64
        %v971 = vpop.permute.xlu0 %970
        %972 = vrot.lane.b32.xlu0 %v347, 64
        %v973 = vpop.permute.xlu0 %972
        %974 = vrot.lane.b32.xlu0 %v348, 64
        %v975 = vpop.permute.xlu0 %974
        %976 = vrot.lane.b32.xlu0 %v350, 64
        %v977 = vpop.permute.xlu0 %976
        %978 = vrot.lane.b32.xlu0 %v351, 64
        %v979 = vpop.permute.xlu0 %978
        %980 = vrot.lane.b32.xlu0 %v353, 64
        %v981 = vpop.permute.xlu0 %980
        %982 = vrot.lane.b32.xlu0 %v354, 64
        %v983 = vpop.permute.xlu0 %982
        %v1016 = vsel %vm855, %v491, %v921
        %v1017 = vsel %vm855, %v493, %v923
        %v1018 = vsel %vm855, %v496, %v925
        %v1019 = vsel %vm855, %v498, %v927
        %v1020 = vsel %vm855, %v501, %v929
        %v1021 = vsel %vm855, %v503, %v931
        %v1022 = vsel %vm855, %v506, %v933
        %v1023 = vsel %vm855, %v508, %v935
        %v1024 = vsel %vm855, %v511, %v937
        %v1025 = vsel %vm855, %v513, %v939
        %v1026 = vsel %vm855, %v516, %v941
        %v1027 = vsel %vm855, %v518, %v943
        %v1028 = vsel %vm855, %v521, %v945
        %v1029 = vsel %vm855, %v523, %v947
        %v1030 = vsel %vm855, %v526, %v949
        %v1031 = vsel %vm855, %v528, %v951
        %v1032 = vsel %vm855, %v531, %v953
        %v1033 = vsel %vm855, %v533, %v955
        %v1034 = vsel %vm855, %v536, %v957
        %v1035 = vsel %vm855, %v538, %v959
        %v1036 = vsel %vm855, %v541, %v961
        %v1037 = vsel %vm855, %v543, %v963
        %v1038 = vsel %vm855, %v546, %v965
        %v1039 = vsel %vm855, %v548, %v967
        %v1040 = vsel %vm855, %v551, %v969
        %v1041 = vsel %vm855, %v553, %v971
        %v1042 = vsel %vm855, %v556, %v973
        %v1043 = vsel %vm855, %v558, %v975
        %v1044 = vsel %vm855, %v561, %v977
        %v1045 = vsel %vm855, %v563, %v979
        %v1046 = vsel %vm855, %v566, %v981
        %v1047 = vsel %vm855, %v568, %v983
        %v1048 = vpack.c.bf16 %v1017, %v1016
        %v1049 = vpack.c.bf16 %v1019, %v1018
        %v1050 = vpack.c.bf16 %v1021, %v1020
        %v1051 = vpack.c.bf16 %v1023, %v1022
        %v1052 = vpack.c.bf16 %v1025, %v1024
        %v1053 = vpack.c.bf16 %v1027, %v1026
        %v1054 = vpack.c.bf16 %v1029, %v1028
        %v1055 = vpack.c.bf16 %v1031, %v1030
        %v1056 = vpack.c.bf16 %v1033, %v1032
        %v1057 = vpack.c.bf16 %v1035, %v1034
        %v1058 = vpack.c.bf16 %v1037, %v1036
        %v1059 = vpack.c.bf16 %v1039, %v1038
        %v1060 = vpack.c.bf16 %v1041, %v1040
        %v1061 = vpack.c.bf16 %v1043, %v1042
        %v1062 = vpack.c.bf16 %v1045, %v1044
        %v1063 = vpack.c.bf16 %v1047, %v1046
        %1064 = vst [vmem:[#allocation2 + $0x8] sm:$0xff] %v1048
        %1065 = vst [vmem:[#allocation2 + $0x30] sm:$0xff] %v1049
        %1066 = vst [vmem:[#allocation2 + $0x58] sm:$0xff] %v1050
        %1067 = vst [vmem:[#allocation2 + $0x80] sm:$0xff] %v1051
        %1068 = vst [vmem:[#allocation2 + $0xa8] sm:$0xff] %v1052
        %1069 = vst [vmem:[#allocation2 + $0xd0] sm:$0xff] %v1053
        %1070 = vst [vmem:[#allocation2 + $0xf8] sm:$0xff] %v1054
        %1071 = vst [vmem:[#allocation2 + $0x120] sm:$0xff] %v1055
        %1072 = vst [vmem:[#allocation2 + $0x148] sm:$0xff] %v1056
        %1073 = vst [vmem:[#allocation2 + $0x170] sm:$0xff] %v1057
        %1074 = vst [vmem:[#allocation2 + $0x198] sm:$0xff] %v1058
        %1075 = vst [vmem:[#allocation2 + $0x1c0] sm:$0xff] %v1059
        %1076 = vst [vmem:[#allocation2 + $0x1e8] sm:$0xff] %v1060
        %1077 = vst [vmem:[#allocation2 + $0x210] sm:$0xff] %v1061
        %1078 = vst [vmem:[#allocation2 + $0x238] sm:$0xff] %v1062
        %1079 = vst [vmem:[#allocation2 + $0x260] sm:$0xff] %v1063
        %1080 = vrot.lane.b32.xlu0 %v496, 64
        %v1081 = vpop.permute.xlu0 %1080
        %1082 = vrot.lane.b32.xlu0 %v498, 64
        %v1083 = vpop.permute.xlu0 %1082
        %1084 = vrot.lane.b32.xlu0 %v501, 64
        %v1085 = vpop.permute.xlu0 %1084
        %1086 = vrot.lane.b32.xlu0 %v503, 64
        %v1087 = vpop.permute.xlu0 %1086
        %1088 = vrot.lane.b32.xlu0 %v506, 64
        %v1089 = vpop.permute.xlu0 %1088
        %1090 = vrot.lane.b32.xlu0 %v508, 64
        %v1091 = vpop.permute.xlu0 %1090
        %1092 = vrot.lane.b32.xlu0 %v511, 64
        %v1093 = vpop.permute.xlu0 %1092
        %1094 = vrot.lane.b32.xlu0 %v513, 64
        %v1095 = vpop.permute.xlu0 %1094
        %1096 = vrot.lane.b32.xlu0 %v516, 64
        %v1097 = vpop.permute.xlu0 %1096
        %1098 = vrot.lane.b32.xlu0 %v518, 64
        %v1099 = vpop.permute.xlu0 %1098
        %1100 = vrot.lane.b32.xlu0 %v521, 64
        %v1101 = vpop.permute.xlu0 %1100
        %1102 = vrot.lane.b32.xlu0 %v523, 64
        %v1103 = vpop.permute.xlu0 %1102
        %1104 = vrot.lane.b32.xlu0 %v526, 64
        %v1105 = vpop.permute.xlu0 %1104
        %1106 = vrot.lane.b32.xlu0 %v528, 64
        %v1107 = vpop.permute.xlu0 %1106
        %1108 = vrot.lane.b32.xlu0 %v531, 64
        %v1109 = vpop.permute.xlu0 %1108
        %1110 = vrot.lane.b32.xlu0 %v533, 64
        %v1111 = vpop.permute.xlu0 %1110
        %1112 = vrot.lane.b32.xlu0 %v536, 64
        %v1113 = vpop.permute.xlu0 %1112
        %1114 = vrot.lane.b32.xlu0 %v538, 64
        %v1115 = vpop.permute.xlu0 %1114
        %1116 = vrot.lane.b32.xlu0 %v541, 64
        %v1117 = vpop.permute.xlu0 %1116
        %1118 = vrot.lane.b32.xlu0 %v543, 64
        %v1119 = vpop.permute.xlu0 %1118
        %1120 = vrot.lane.b32.xlu0 %v546, 64
        %v1121 = vpop.permute.xlu0 %1120
        %1122 = vrot.lane.b32.xlu0 %v548, 64
        %v1123 = vpop.permute.xlu0 %1122
        %1124 = vrot.lane.b32.xlu0 %v551, 64
        %v1125 = vpop.permute.xlu0 %1124
        %1126 = vrot.lane.b32.xlu0 %v553, 64
        %v1127 = vpop.permute.xlu0 %1126
        %1128 = vrot.lane.b32.xlu0 %v556, 64
        %v1129 = vpop.permute.xlu0 %1128
        %1130 = vrot.lane.b32.xlu0 %v558, 64
        %v1131 = vpop.permute.xlu0 %1130
        %1132 = vrot.lane.b32.xlu0 %v561, 64
        %v1133 = vpop.permute.xlu0 %1132
        %1134 = vrot.lane.b32.xlu0 %v563, 64
        %v1135 = vpop.permute.xlu0 %1134
        %1136 = vrot.lane.b32.xlu0 %v566, 64
        %v1137 = vpop.permute.xlu0 %1136
        %1138 = vrot.lane.b32.xlu0 %v568, 64
        %v1139 = vpop.permute.xlu0 %1138
        %1140 = vrot.lane.b32.xlu0 %v643, 64
        %v1141 = vpop.permute.xlu0 %1140
        %1142 = vrot.lane.b32.xlu0 %v645, 64
        %v1143 = vpop.permute.xlu0 %1142
        %v1176 = vsel %vm855, %v415, %v1081
        %v1177 = vsel %vm855, %v417, %v1083
        %v1178 = vsel %vm855, %v420, %v1085
        %v1179 = vsel %vm855, %v422, %v1087
        %v1180 = vsel %vm855, %v425, %v1089
        %v1181 = vsel %vm855, %v427, %v1091
        %v1182 = vsel %vm855, %v430, %v1093
        %v1183 = vsel %vm855, %v432, %v1095
        %v1184 = vsel %vm855, %v435, %v1097
        %v1185 = vsel %vm855, %v437, %v1099
        %v1186 = vsel %vm855, %v440, %v1101
        %v1187 = vsel %vm855, %v442, %v1103
        %v1188 = vsel %vm855, %v445, %v1105
        %v1189 = vsel %vm855, %v447, %v1107
        %v1190 = vsel %vm855, %v450, %v1109
        %v1191 = vsel %vm855, %v452, %v1111
        %v1192 = vsel %vm855, %v455, %v1113
        %v1193 = vsel %vm855, %v457, %v1115
        %v1194 = vsel %vm855, %v460, %v1117
        %v1195 = vsel %vm855, %v462, %v1119
        %v1196 = vsel %vm855, %v465, %v1121
        %v1197 = vsel %vm855, %v467, %v1123
        %v1198 = vsel %vm855, %v470, %v1125
        %v1199 = vsel %vm855, %v472, %v1127
        %v1200 = vsel %vm855, %v475, %v1129
        %v1201 = vsel %vm855, %v477, %v1131
        %v1202 = vsel %vm855, %v480, %v1133
        %v1203 = vsel %vm855, %v482, %v1135
        %v1204 = vsel %vm855, %v485, %v1137
        %v1205 = vsel %vm855, %v487, %v1139
        %v1206 = vsel %vm855, %v606, %v1141
        %v1207 = vsel %vm855, %v608, %v1143
        %v1208 = vpack.c.bf16 %v1177, %v1176
        %v1209 = vpack.c.bf16 %v1179, %v1178
        %v1210 = vpack.c.bf16 %v1181, %v1180
        %v1211 = vpack.c.bf16 %v1183, %v1182
        %v1212 = vpack.c.bf16 %v1185, %v1184
        %v1213 = vpack.c.bf16 %v1187, %v1186
        %v1214 = vpack.c.bf16 %v1189, %v1188
        %v1215 = vpack.c.bf16 %v1191, %v1190
        %v1216 = vpack.c.bf16 %v1193, %v1192
        %v1217 = vpack.c.bf16 %v1195, %v1194
        %v1218 = vpack.c.bf16 %v1197, %v1196
        %v1219 = vpack.c.bf16 %v1199, %v1198
        %v1220 = vpack.c.bf16 %v1201, %v1200
        %v1221 = vpack.c.bf16 %v1203, %v1202
        %v1222 = vpack.c.bf16 %v1205, %v1204
        %v1223 = vpack.c.bf16 %v1207, %v1206
        %1224 = vst [vmem:[#allocation2 + $0x10] sm:$0xff] %v1208
        %1225 = vst [vmem:[#allocation2 + $0x38] sm:$0xff] %v1209
        %1226 = vst [vmem:[#allocation2 + $0x60] sm:$0xff] %v1210
        %1227 = vst [vmem:[#allocation2 + $0x88] sm:$0xff] %v1211
        %1228 = vst [vmem:[#allocation2 + $0xb0] sm:$0xff] %v1212
        %1229 = vst [vmem:[#allocation2 + $0xd8] sm:$0xff] %v1213
        %1230 = vst [vmem:[#allocation2 + $0x100] sm:$0xff] %v1214
        %1231 = vst [vmem:[#allocation2 + $0x128] sm:$0xff] %v1215
        %1232 = vst [vmem:[#allocation2 + $0x150] sm:$0xff] %v1216
        %1233 = vst [vmem:[#allocation2 + $0x178] sm:$0xff] %v1217
        %1234 = vst [vmem:[#allocation2 + $0x1a0] sm:$0xff] %v1218
        %1235 = vst [vmem:[#allocation2 + $0x1c8] sm:$0xff] %v1219
        %1236 = vst [vmem:[#allocation2 + $0x1f0] sm:$0xff] %v1220
        %1237 = vst [vmem:[#allocation2 + $0x218] sm:$0xff] %v1221
        %1238 = vst [vmem:[#allocation2 + $0x240] sm:$0xff] %v1222
        %1239 = vst [vmem:[#allocation2 + $0x268] sm:$0xff] %v1223
        %1240 = vrot.lane.b32.xlu0 %v606, 64
        %v1241 = vpop.permute.xlu0 %1240
        %1242 = vrot.lane.b32.xlu0 %v608, 64
        %v1243 = vpop.permute.xlu0 %1242
        %1244 = vrot.lane.b32.xlu0 %v651, 64
        %v1245 = vpop.permute.xlu0 %1244
        %1246 = vrot.lane.b32.xlu0 %v653, 64
        %v1247 = vpop.permute.xlu0 %1246
        %v1252 = vsel %vm855, %v353, %v1241
        %v1253 = vsel %vm855, %v354, %v1243
        %v1254 = vsel %vm855, %v356, %v1245
        %v1255 = vsel %vm855, %v357, %v1247
        %v1256 = vpack.c.bf16 %v1253, %v1252
        %v1257 = vpack.c.bf16 %v1255, %v1254
        %1258 = vst [vmem:[#allocation2 + $0x18] sm:$0xff] %v890
        %1259 = vst [vmem:[#allocation2 + $0x40] sm:$0xff] %v891
        %1260 = vst [vmem:[#allocation2 + $0x68] sm:$0xff] %v892
        %1261 = vst [vmem:[#allocation2 + $0x90] sm:$0xff] %v893
        %1262 = vst [vmem:[#allocation2 + $0xb8] sm:$0xff] %v894
        %1263 = vst [vmem:[#allocation2 + $0xe0] sm:$0xff] %v895
        %1264 = vst [vmem:[#allocation2 + $0x108] sm:$0xff] %v896
        %1265 = vst [vmem:[#allocation2 + $0x130] sm:$0xff] %v897
        %1266 = vst [vmem:[#allocation2 + $0x158] sm:$0xff] %v898
        %1267 = vst [vmem:[#allocation2 + $0x180] sm:$0xff] %v899
        %1268 = vst [vmem:[#allocation2 + $0x1a8] sm:$0xff] %v900
        %1269 = vst [vmem:[#allocation2 + $0x1d0] sm:$0xff] %v901
        %1270 = vst [vmem:[#allocation2 + $0x1f8] sm:$0xff] %v902
        %1271 = vst [vmem:[#allocation2 + $0x220] sm:$0xff] %v903
        %1272 = vst [vmem:[#allocation2 + $0x248] sm:$0xff] %v1256
        %1273 = vst [vmem:[#allocation2 + $0x270] sm:$0xff] %v1257
        %1306 = vrot.lane.b32.xlu0 %v727, 64
        %v1307 = vpop.permute.xlu0 %1306
        %1308 = vrot.lane.b32.xlu0 %v728, 64
        %v1309 = vpop.permute.xlu0 %1308
        %1310 = vrot.lane.b32.xlu0 %v729, 64
        %v1311 = vpop.permute.xlu0 %1310
        %1312 = vrot.lane.b32.xlu0 %v730, 64
        %v1313 = vpop.permute.xlu0 %1312
        %1314 = vrot.lane.b32.xlu0 %v731, 64
        %v1315 = vpop.permute.xlu0 %1314
        %1316 = vrot.lane.b32.xlu0 %v732, 64
        %v1317 = vpop.permute.xlu0 %1316
        %1318 = vrot.lane.b32.xlu0 %v733, 64
        %v1319 = vpop.permute.xlu0 %1318
        %1320 = vrot.lane.b32.xlu0 %v734, 64
        %v1321 = vpop.permute.xlu0 %1320
        %1322 = vrot.lane.b32.xlu0 %v735, 64
        %v1323 = vpop.permute.xlu0 %1322
        %1324 = vrot.lane.b32.xlu0 %v736, 64
        %v1325 = vpop.permute.xlu0 %1324
        %1326 = vrot.lane.b32.xlu0 %v737, 64
        %v1327 = vpop.permute.xlu0 %1326
        %1328 = vrot.lane.b32.xlu0 %v738, 64
        %v1329 = vpop.permute.xlu0 %1328
        %1330 = vrot.lane.b32.xlu0 %v739, 64
        %v1331 = vpop.permute.xlu0 %1330
        %1332 = vrot.lane.b32.xlu0 %v740, 64
        %v1333 = vpop.permute.xlu0 %1332
        %1334 = vrot.lane.b32.xlu0 %v741, 64
        %v1335 = vpop.permute.xlu0 %1334
        %1336 = vrot.lane.b32.xlu0 %v742, 64
        %v1337 = vpop.permute.xlu0 %1336
        %1338 = vrot.lane.b32.xlu0 %v743, 64
        %v1339 = vpop.permute.xlu0 %1338
        %1340 = vrot.lane.b32.xlu0 %v744, 64
        %v1341 = vpop.permute.xlu0 %1340
        %1342 = vrot.lane.b32.xlu0 %v745, 64
        %v1343 = vpop.permute.xlu0 %1342
        %1344 = vrot.lane.b32.xlu0 %v746, 64
        %v1345 = vpop.permute.xlu0 %1344
        %1346 = vrot.lane.b32.xlu0 %v747, 64
        %v1347 = vpop.permute.xlu0 %1346
        %1348 = vrot.lane.b32.xlu0 %v748, 64
        %v1349 = vpop.permute.xlu0 %1348
        %1350 = vrot.lane.b32.xlu0 %v749, 64
        %v1351 = vpop.permute.xlu0 %1350
        %1352 = vrot.lane.b32.xlu0 %v750, 64
        %v1353 = vpop.permute.xlu0 %1352
        %1354 = vrot.lane.b32.xlu0 %v751, 64
        %v1355 = vpop.permute.xlu0 %1354
        %1356 = vrot.lane.b32.xlu0 %v752, 64
        %v1357 = vpop.permute.xlu0 %1356
        %1358 = vrot.lane.b32.xlu0 %v753, 64
        %v1359 = vpop.permute.xlu0 %1358
        %1360 = vrot.lane.b32.xlu0 %v754, 64
        %v1361 = vpop.permute.xlu0 %1360
        %1362 = vrot.lane.b32.xlu0 %v755, 64
        %v1363 = vpop.permute.xlu0 %1362
        %1364 = vrot.lane.b32.xlu0 %v756, 64
        %v1365 = vpop.permute.xlu0 %1364
        %1366 = vrot.lane.b32.xlu0 %v757, 64
        %v1367 = vpop.permute.xlu0 %1366
        %1368 = vrot.lane.b32.xlu0 %v758, 64
        %v1369 = vpop.permute.xlu0 %1368
        %v1402 = vsel %vm855, %v501, %v1307
        %v1403 = vsel %vm855, %v503, %v1309
        %v1404 = vsel %vm855, %v506, %v1311
        %v1405 = vsel %vm855, %v508, %v1313
        %v1406 = vsel %vm855, %v511, %v1315
        %v1407 = vsel %vm855, %v513, %v1317
        %v1408 = vsel %vm855, %v516, %v1319
        %v1409 = vsel %vm855, %v518, %v1321
        %v1410 = vsel %vm855, %v521, %v1323
        %v1411 = vsel %vm855, %v523, %v1325
        %v1412 = vsel %vm855, %v526, %v1327
        %v1413 = vsel %vm855, %v528, %v1329
        %v1414 = vsel %vm855, %v531, %v1331
        %v1415 = vsel %vm855, %v533, %v1333
        %v1416 = vsel %vm855, %v536, %v1335
        %v1417 = vsel %vm855, %v538, %v1337
        %v1418 = vsel %vm855, %v541, %v1339
        %v1419 = vsel %vm855, %v543, %v1341
        %v1420 = vsel %vm855, %v546, %v1343
        %v1421 = vsel %vm855, %v548, %v1345
        %v1422 = vsel %vm855, %v551, %v1347
        %v1423 = vsel %vm855, %v553, %v1349
        %v1424 = vsel %vm855, %v556, %v1351
        %v1425 = vsel %vm855, %v558, %v1353
        %v1426 = vsel %vm855, %v561, %v1355
        %v1427 = vsel %vm855, %v563, %v1357
        %v1428 = vsel %vm855, %v566, %v1359
        %v1429 = vsel %vm855, %v568, %v1361
        %v1430 = vsel %vm855, %v643, %v1363
        %v1431 = vsel %vm855, %v645, %v1365
        %v1432 = vsel %vm855, %v656, %v1367
        %v1433 = vsel %vm855, %v658, %v1369
        %v1434 = vpack.c.bf16 %v1403, %v1402
        %v1435 = vpack.c.bf16 %v1405, %v1404
        %v1436 = vpack.c.bf16 %v1407, %v1406
        %v1437 = vpack.c.bf16 %v1409, %v1408
        %v1438 = vpack.c.bf16 %v1411, %v1410
        %v1439 = vpack.c.bf16 %v1413, %v1412
        %v1440 = vpack.c.bf16 %v1415, %v1414
        %v1441 = vpack.c.bf16 %v1417, %v1416
        %v1442 = vpack.c.bf16 %v1419, %v1418
        %v1443 = vpack.c.bf16 %v1421, %v1420
        %v1444 = vpack.c.bf16 %v1423, %v1422
        %v1445 = vpack.c.bf16 %v1425, %v1424
        %v1446 = vpack.c.bf16 %v1427, %v1426
        %v1447 = vpack.c.bf16 %v1429, %v1428
        %v1448 = vpack.c.bf16 %v1431, %v1430
        %v1449 = vpack.c.bf16 %v1433, %v1432
        %1450 = vst [vmem:[#allocation2 + $0x20] sm:$0xff] %v1434
        %1451 = vst [vmem:[#allocation2 + $0x48] sm:$0xff] %v1435
        %1452 = vst [vmem:[#allocation2 + $0x70] sm:$0xff] %v1436
        %1453 = vst [vmem:[#allocation2 + $0x98] sm:$0xff] %v1437
        %1454 = vst [vmem:[#allocation2 + $0xc0] sm:$0xff] %v1438
        %1455 = vst [vmem:[#allocation2 + $0xe8] sm:$0xff] %v1439
        %1456 = vst [vmem:[#allocation2 + $0x110] sm:$0xff] %v1440
        %1457 = vst [vmem:[#allocation2 + $0x138] sm:$0xff] %v1441
        %1458 = vst [vmem:[#allocation2 + $0x160] sm:$0xff] %v1442
        %1459 = vst [vmem:[#allocation2 + $0x188] sm:$0xff] %v1443
        %1460 = vst [vmem:[#allocation2 + $0x1b0] sm:$0xff] %v1444
        %1461 = vst [vmem:[#allocation2 + $0x1d8] sm:$0xff] %v1445
        %1462 = vst [vmem:[#allocation2 + $0x200] sm:$0xff] %v1446
        %1463 = vst [vmem:[#allocation2 + $0x228] sm:$0xff] %v1447
        %1464 = vst [vmem:[#allocation2 + $0x250] sm:$0xff] %v1448
        %1465 = vst [vmem:[#allocation2 + $0x278] sm:$0xff] %v1449
        %v1466 = vld [vmem:[#allocation2] sm:$0xff]
        %v1467 = vld [vmem:[#allocation2 + $0x8] sm:$0xff]
        %v1468 = vld [vmem:[#allocation2 + $0x10] sm:$0xff]
        %v1469 = vld [vmem:[#allocation2 + $0x18] sm:$0xff]
        %v1470 = vld [vmem:[#allocation2 + $0x20] sm:$0xff]
        %v1471 = vld [vmem:[#allocation2 + $0x28] sm:$0xff]
        %v1472 = vld [vmem:[#allocation2 + $0x30] sm:$0xff]
        %v1473 = vld [vmem:[#allocation2 + $0x38] sm:$0xff]
        %v1474 = vld [vmem:[#allocation2 + $0x40] sm:$0xff]
        %v1475 = vld [vmem:[#allocation2 + $0x48] sm:$0xff]
        %v1476 = vld [vmem:[#allocation2 + $0x50] sm:$0xff]
        %v1477 = vld [vmem:[#allocation2 + $0x58] sm:$0xff]
        %v1478 = vld [vmem:[#allocation2 + $0x60] sm:$0xff]
        %v1479 = vld [vmem:[#allocation2 + $0x68] sm:$0xff]
        %v1480 = vld [vmem:[#allocation2 + $0x70] sm:$0xff]
        %v1481 = vld [vmem:[#allocation2 + $0x78] sm:$0xff]
        %v1482 = vld [vmem:[#allocation2 + $0x80] sm:$0xff]
        %v1483 = vld [vmem:[#allocation2 + $0x88] sm:$0xff]
        %v1484 = vld [vmem:[#allocation2 + $0x90] sm:$0xff]
        %v1485 = vld [vmem:[#allocation2 + $0x98] sm:$0xff]
        %v1486 = vld [vmem:[#allocation2 + $0xa0] sm:$0xff]
        %v1487 = vld [vmem:[#allocation2 + $0xa8] sm:$0xff]
        %v1488 = vld [vmem:[#allocation2 + $0xb0] sm:$0xff]
        %v1489 = vld [vmem:[#allocation2 + $0xb8] sm:$0xff]
        %v1490 = vld [vmem:[#allocation2 + $0xc0] sm:$0xff]
        %v1491 = vld [vmem:[#allocation2 + $0xc8] sm:$0xff]
        %v1492 = vld [vmem:[#allocation2 + $0xd0] sm:$0xff]
        %v1493 = vld [vmem:[#allocation2 + $0xd8] sm:$0xff]
        %v1494 = vld [vmem:[#allocation2 + $0xe0] sm:$0xff]
        %v1495 = vld [vmem:[#allocation2 + $0xe8] sm:$0xff]
        %v1496 = vld [vmem:[#allocation2 + $0xf0] sm:$0xff]
        %v1497 = vld [vmem:[#allocation2 + $0xf8] sm:$0xff]
        %v1498 = vld [vmem:[#allocation2 + $0x100] sm:$0xff]
        %v1499 = vld [vmem:[#allocation2 + $0x108] sm:$0xff]
        %v1500 = vld [vmem:[#allocation2 + $0x110] sm:$0xff]
        %v1501 = vld [vmem:[#allocation2 + $0x118] sm:$0xff]
        %v1502 = vld [vmem:[#allocation2 + $0x120] sm:$0xff]
        %v1503 = vld [vmem:[#allocation2 + $0x128] sm:$0xff]
        %v1504 = vld [vmem:[#allocation2 + $0x130] sm:$0xff]
        %v1505 = vld [vmem:[#allocation2 + $0x138] sm:$0xff]
        %v1506 = vld [vmem:[#allocation2 + $0x140] sm:$0xff]
        %v1507 = vld [vmem:[#allocation2 + $0x148] sm:$0xff]
        %v1508 = vld [vmem:[#allocation2 + $0x150] sm:$0xff]
        %v1509 = vld [vmem:[#allocation2 + $0x158] sm:$0xff]
        %v1510 = vld [vmem:[#allocation2 + $0x160] sm:$0xff]
        %v1511 = vld [vmem:[#allocation2 + $0x168] sm:$0xff]
        %v1512 = vld [vmem:[#allocation2 + $0x170] sm:$0xff]
        %v1513 = vld [vmem:[#allocation2 + $0x178] sm:$0xff]
        %v1514 = vld [vmem:[#allocation2 + $0x180] sm:$0xff]
        %v1515 = vld [vmem:[#allocation2 + $0x188] sm:$0xff]
        %v1516 = vld [vmem:[#allocation2 + $0x190] sm:$0xff]
        %v1517 = vld [vmem:[#allocation2 + $0x198] sm:$0xff]
        %v1518 = vld [vmem:[#allocation2 + $0x1a0] sm:$0xff]
        %v1519 = vld [vmem:[#allocation2 + $0x1a8] sm:$0xff]
        %v1520 = vld [vmem:[#allocation2 + $0x1b0] sm:$0xff]
        %v1521 = vld [vmem:[#allocation2 + $0x1b8] sm:$0xff]
        %v1522 = vld [vmem:[#allocation2 + $0x1c0] sm:$0xff]
        %v1523 = vld [vmem:[#allocation2 + $0x1c8] sm:$0xff]
        %v1524 = vld [vmem:[#allocation2 + $0x1d0] sm:$0xff]
        %v1525 = vld [vmem:[#allocation2 + $0x1d8] sm:$0xff]
        %v1526 = vld [vmem:[#allocation2 + $0x1e0] sm:$0xff]
        %v1527 = vld [vmem:[#allocation2 + $0x1e8] sm:$0xff]
        %v1528 = vld [vmem:[#allocation2 + $0x1f0] sm:$0xff]
        %v1529 = vld [vmem:[#allocation2 + $0x1f8] sm:$0xff]
        %v1530 = vld [vmem:[#allocation2 + $0x200] sm:$0xff]
        %v1531 = vld [vmem:[#allocation2 + $0x208] sm:$0xff]
        %v1532 = vld [vmem:[#allocation2 + $0x210] sm:$0xff]
        %v1533 = vld [vmem:[#allocation2 + $0x218] sm:$0xff]
        %v1534 = vld [vmem:[#allocation2 + $0x220] sm:$0xff]
        %v1535 = vld [vmem:[#allocation2 + $0x228] sm:$0xff]
        %v1536 = vld [vmem:[#allocation2 + $0x230] sm:$0xff]
        %v1537 = vld [vmem:[#allocation2 + $0x238] sm:$0xff]
        %v1538 = vld [vmem:[#allocation2 + $0x240] sm:$0xff]
        %v1539 = vld [vmem:[#allocation2 + $0x248] sm:$0xff]
        %v1540 = vld [vmem:[#allocation2 + $0x250] sm:$0xff]
        %v1541 = vld [vmem:[#allocation2 + $0x258] sm:$0xff]
        %v1542 = vld [vmem:[#allocation2 + $0x260] sm:$0xff]
        %v1543 = vld [vmem:[#allocation2 + $0x268] sm:$0xff]
        %v1544 = vld [vmem:[#allocation2 + $0x270] sm:$0xff]
        %v1545 = vld [vmem:[#allocation2 + $0x278] sm:$0xff]
        %v1546 = vld [vmem:[%s1] sm:$0xff]
        %v1547 = vld [vmem:[%s1 + $0x8] sm:$0xff]
        %v1548 = vld [vmem:[%s1 + $0x10] sm:$0xff]
        %v1549 = vld [vmem:[%s1 + $0x18] sm:$0xff]
        %v1550 = vld [vmem:[%s1 + $0x20] sm:$0xff]
        %v1551 = vld [vmem:[%s1 + $0x28] sm:$0xff]
        %v1552 = vld [vmem:[%s1 + $0x30] sm:$0xff]
        %v1553 = vld [vmem:[%s1 + $0x38] sm:$0xff]
        %v1554 = vld [vmem:[%s1 + $0x40] sm:$0xff]
        %v1555 = vld [vmem:[%s1 + $0x48] sm:$0xff]
        %v1556 = vld [vmem:[%s1 + $0x50] sm:$0xff]
        %v1557 = vld [vmem:[%s1 + $0x58] sm:$0xff]
        %v1558 = vld [vmem:[%s1 + $0x60] sm:$0xff]
        %v1559 = vld [vmem:[%s1 + $0x68] sm:$0xff]
        %v1560 = vld [vmem:[%s1 + $0x70] sm:$0xff]
        %v1561 = vld [vmem:[%s1 + $0x78] sm:$0xff]
        %v1562 = vld [vmem:[%s1 + $0x80] sm:$0xff]
        %v1563 = vld [vmem:[%s1 + $0x88] sm:$0xff]
        %v1564 = vld [vmem:[%s1 + $0x90] sm:$0xff]
        %v1565 = vld [vmem:[%s1 + $0x98] sm:$0xff]
        %v1566 = vld [vmem:[%s1 + $0xa0] sm:$0xff]
        %v1567 = vld [vmem:[%s1 + $0xa8] sm:$0xff]
        %v1568 = vld [vmem:[%s1 + $0xb0] sm:$0xff]
        %v1569 = vld [vmem:[%s1 + $0xb8] sm:$0xff]
        %v1570 = vld [vmem:[%s1 + $0xc0] sm:$0xff]
        %v1571 = vld [vmem:[%s1 + $0xc8] sm:$0xff]
        %v1572 = vld [vmem:[%s1 + $0xd0] sm:$0xff]
        %v1573 = vld [vmem:[%s1 + $0xd8] sm:$0xff]
        %v1574 = vld [vmem:[%s1 + $0xe0] sm:$0xff]
        %v1575 = vld [vmem:[%s1 + $0xe8] sm:$0xff]
        %v1576 = vld [vmem:[%s1 + $0xf0] sm:$0xff]
        %v1577 = vld [vmem:[%s1 + $0xf8] sm:$0xff]
        %v1578 = vld [vmem:[%s1 + $0x100] sm:$0xff]
        %v1579 = vld [vmem:[%s1 + $0x108] sm:$0xff]
        %v1580 = vld [vmem:[%s1 + $0x110] sm:$0xff]
        %v1581 = vld [vmem:[%s1 + $0x118] sm:$0xff]
        %v1582 = vld [vmem:[%s1 + $0x120] sm:$0xff]
        %v1583 = vld [vmem:[%s1 + $0x128] sm:$0xff]
        %v1584 = vld [vmem:[%s1 + $0x130] sm:$0xff]
        %v1585 = vld [vmem:[%s1 + $0x138] sm:$0xff]
        %v1586 = vld [vmem:[%s1 + $0x140] sm:$0xff]
        %v1587 = vld [vmem:[%s1 + $0x148] sm:$0xff]
        %v1588 = vld [vmem:[%s1 + $0x150] sm:$0xff]
        %v1589 = vld [vmem:[%s1 + $0x158] sm:$0xff]
        %v1590 = vld [vmem:[%s1 + $0x160] sm:$0xff]
        %v1591 = vld [vmem:[%s1 + $0x168] sm:$0xff]
        %v1592 = vld [vmem:[%s1 + $0x170] sm:$0xff]
        %v1593 = vld [vmem:[%s1 + $0x178] sm:$0xff]
        %v1594 = vld [vmem:[%s1 + $0x180] sm:$0xff]
        %v1595 = vld [vmem:[%s1 + $0x188] sm:$0xff]
        %v1596 = vld [vmem:[%s1 + $0x190] sm:$0xff]
        %v1597 = vld [vmem:[%s1 + $0x198] sm:$0xff]
        %v1598 = vld [vmem:[%s1 + $0x1a0] sm:$0xff]
        %v1599 = vld [vmem:[%s1 + $0x1a8] sm:$0xff]
        %v1600 = vld [vmem:[%s1 + $0x1b0] sm:$0xff]
        %v1601 = vld [vmem:[%s1 + $0x1b8] sm:$0xff]
        %v1602 = vld [vmem:[%s1 + $0x1c0] sm:$0xff]
        %v1603 = vld [vmem:[%s1 + $0x1c8] sm:$0xff]
        %v1604 = vld [vmem:[%s1 + $0x1d0] sm:$0xff]
        %v1605 = vld [vmem:[%s1 + $0x1d8] sm:$0xff]
        %v1606 = vld [vmem:[%s1 + $0x1e0] sm:$0xff]
        %v1607 = vld [vmem:[%s1 + $0x1e8] sm:$0xff]
        %v1608 = vld [vmem:[%s1 + $0x1f0] sm:$0xff]
        %v1609 = vld [vmem:[%s1 + $0x1f8] sm:$0xff]
        %v1610 = vld [vmem:[%s1 + $0x200] sm:$0xff]
        %v1611 = vld [vmem:[%s1 + $0x208] sm:$0xff]
        %v1612 = vld [vmem:[%s1 + $0x210] sm:$0xff]
        %v1613 = vld [vmem:[%s1 + $0x218] sm:$0xff]
        %v1614 = vld [vmem:[%s1 + $0x220] sm:$0xff]
        %v1615 = vld [vmem:[%s1 + $0x228] sm:$0xff]
        %v1616 = vld [vmem:[%s1 + $0x230] sm:$0xff]
        %v1617 = vld [vmem:[%s1 + $0x238] sm:$0xff]
        %v1618 = vld [vmem:[%s1 + $0x240] sm:$0xff]
        %v1619 = vld [vmem:[%s1 + $0x248] sm:$0xff]
        %v1620 = vld [vmem:[%s1 + $0x250] sm:$0xff]
        %v1621 = vld [vmem:[%s1 + $0x258] sm:$0xff]
        %v1622 = vld [vmem:[%s1 + $0x260] sm:$0xff]
        %v1623 = vld [vmem:[%s1 + $0x268] sm:$0xff]
        %v1624 = vld [vmem:[%s1 + $0x270] sm:$0xff]
        %v1625 = vld [vmem:[%s1 + $0x278] sm:$0xff]
        %v1626 = vld [vmem:[%s2] sm:$0x3]
        %v1628 = vlaneseq
        %v1629 = vshrl.u32 %v1628, 7
        %v1630 = vsub.s32 0, %v1629
        %v1631 = vrot.slane %v1626, %v1630
        %v1632 = vlaneseq
        %v1633 = vshrl.u32 %v1632, 7
        %v1634 = vsub.s32 1, %v1633
        %v1635 = vrot.slane %v1626, %v1634
        %v1718 = vunpack.c.l.b16 %v1546
        %v1719 = vunpack.c.h.b16 %v1546
        %v1720 = vunpack.c.l.b16 %v1547
        %v1721 = vunpack.c.h.b16 %v1547
        %v1722 = vunpack.c.l.b16 %v1548
        %v1723 = vunpack.c.h.b16 %v1548
        %v1724 = vunpack.c.l.b16 %v1549
        %v1725 = vunpack.c.h.b16 %v1549
        %v1726 = vunpack.c.l.b16 %v1550
        %v1727 = vunpack.c.h.b16 %v1550
        %v1728 = vunpack.c.l.b16 %v1551
        %v1729 = vunpack.c.h.b16 %v1551
        %v1730 = vunpack.c.l.b16 %v1552
        %v1731 = vunpack.c.h.b16 %v1552
        %v1732 = vunpack.c.l.b16 %v1553
        %v1733 = vunpack.c.h.b16 %v1553
        %v1734 = vunpack.c.l.b16 %v1554
        %v1735 = vunpack.c.h.b16 %v1554
        %v1736 = vunpack.c.l.b16 %v1555
        %v1737 = vunpack.c.h.b16 %v1555
        %v1738 = vunpack.c.l.b16 %v1556
        %v1739 = vunpack.c.h.b16 %v1556
        %v1740 = vunpack.c.l.b16 %v1557
        %v1741 = vunpack.c.h.b16 %v1557
        %v1742 = vunpack.c.l.b16 %v1558
        %v1743 = vunpack.c.h.b16 %v1558
        %v1744 = vunpack.c.l.b16 %v1559
        %v1745 = vunpack.c.h.b16 %v1559
        %v1746 = vunpack.c.l.b16 %v1560
        %v1747 = vunpack.c.h.b16 %v1560
        %v1748 = vunpack.c.l.b16 %v1561
        %v1749 = vunpack.c.h.b16 %v1561
        %v1750 = vunpack.c.l.b16 %v1562
        %v1751 = vunpack.c.h.b16 %v1562
        %v1752 = vunpack.c.l.b16 %v1563
        %v1753 = vunpack.c.h.b16 %v1563
        %v1754 = vunpack.c.l.b16 %v1564
        %v1755 = vunpack.c.h.b16 %v1564
        %v1756 = vunpack.c.l.b16 %v1565
        %v1757 = vunpack.c.h.b16 %v1565
        %v1758 = vunpack.c.l.b16 %v1566
        %v1759 = vunpack.c.h.b16 %v1566
        %v1760 = vunpack.c.l.b16 %v1567
        %v1761 = vunpack.c.h.b16 %v1567
        %v1762 = vunpack.c.l.b16 %v1568
        %v1763 = vunpack.c.h.b16 %v1568
        %v1764 = vunpack.c.l.b16 %v1569
        %v1765 = vunpack.c.h.b16 %v1569
        %v1766 = vunpack.c.l.b16 %v1570
        %v1767 = vunpack.c.h.b16 %v1570
        %v1768 = vunpack.c.l.b16 %v1571
        %v1769 = vunpack.c.h.b16 %v1571
        %v1770 = vunpack.c.l.b16 %v1572
        %v1771 = vunpack.c.h.b16 %v1572
        %v1772 = vunpack.c.l.b16 %v1573
        %v1773 = vunpack.c.h.b16 %v1573
        %v1774 = vunpack.c.l.b16 %v1574
        %v1775 = vunpack.c.h.b16 %v1574
        %v1776 = vunpack.c.l.b16 %v1575
        %v1777 = vunpack.c.h.b16 %v1575
        %v1778 = vunpack.c.l.b16 %v1576
        %v1779 = vunpack.c.h.b16 %v1576
        %v1780 = vunpack.c.l.b16 %v1577
        %v1781 = vunpack.c.h.b16 %v1577
        %v1782 = vunpack.c.l.b16 %v1578
        %v1783 = vunpack.c.h.b16 %v1578
        %v1784 = vunpack.c.l.b16 %v1579
        %v1785 = vunpack.c.h.b16 %v1579
        %v1786 = vunpack.c.l.b16 %v1580
        %v1787 = vunpack.c.h.b16 %v1580
        %v1788 = vunpack.c.l.b16 %v1581
        %v1789 = vunpack.c.h.b16 %v1581
        %v1790 = vunpack.c.l.b16 %v1582
        %v1791 = vunpack.c.h.b16 %v1582
        %v1792 = vunpack.c.l.b16 %v1583
        %v1793 = vunpack.c.h.b16 %v1583
        %v1794 = vunpack.c.l.b16 %v1584
        %v1795 = vunpack.c.h.b16 %v1584
        %v1796 = vunpack.c.l.b16 %v1585
        %v1797 = vunpack.c.h.b16 %v1585
        %v1798 = vunpack.c.l.b16 %v1586
        %v1799 = vunpack.c.h.b16 %v1586
        %v1800 = vunpack.c.l.b16 %v1587
        %v1801 = vunpack.c.h.b16 %v1587
        %v1802 = vunpack.c.l.b16 %v1588
        %v1803 = vunpack.c.h.b16 %v1588
        %v1804 = vunpack.c.l.b16 %v1589
        %v1805 = vunpack.c.h.b16 %v1589
        %v1806 = vunpack.c.l.b16 %v1590
        %v1807 = vunpack.c.h.b16 %v1590
        %v1808 = vunpack.c.l.b16 %v1591
        %v1809 = vunpack.c.h.b16 %v1591
        %v1810 = vunpack.c.l.b16 %v1592
        %v1811 = vunpack.c.h.b16 %v1592
        %v1812 = vunpack.c.l.b16 %v1593
        %v1813 = vunpack.c.h.b16 %v1593
        %v1814 = vunpack.c.l.b16 %v1594
        %v1815 = vunpack.c.h.b16 %v1594
        %v1816 = vunpack.c.l.b16 %v1595
        %v1817 = vunpack.c.h.b16 %v1595
        %v1818 = vunpack.c.l.b16 %v1596
        %v1819 = vunpack.c.h.b16 %v1596
        %v1820 = vunpack.c.l.b16 %v1597
        %v1821 = vunpack.c.h.b16 %v1597
        %v1822 = vunpack.c.l.b16 %v1598
        %v1823 = vunpack.c.h.b16 %v1598
        %v1824 = vunpack.c.l.b16 %v1599
        %v1825 = vunpack.c.h.b16 %v1599
        %v1826 = vunpack.c.l.b16 %v1600
        %v1827 = vunpack.c.h.b16 %v1600
        %v1828 = vunpack.c.l.b16 %v1601
        %v1829 = vunpack.c.h.b16 %v1601
        %v1830 = vunpack.c.l.b16 %v1602
        %v1831 = vunpack.c.h.b16 %v1602
        %v1832 = vunpack.c.l.b16 %v1603
        %v1833 = vunpack.c.h.b16 %v1603
        %v1834 = vunpack.c.l.b16 %v1604
        %v1835 = vunpack.c.h.b16 %v1604
        %v1836 = vunpack.c.l.b16 %v1605
        %v1837 = vunpack.c.h.b16 %v1605
        %v1838 = vunpack.c.l.b16 %v1606
        %v1839 = vunpack.c.h.b16 %v1606
        %v1840 = vunpack.c.l.b16 %v1607
        %v1841 = vunpack.c.h.b16 %v1607
        %v1842 = vunpack.c.l.b16 %v1608
        %v1843 = vunpack.c.h.b16 %v1608
        %v1844 = vunpack.c.l.b16 %v1609
        %v1845 = vunpack.c.h.b16 %v1609
        %v1846 = vunpack.c.l.b16 %v1610
        %v1847 = vunpack.c.h.b16 %v1610
        %v1848 = vunpack.c.l.b16 %v1611
        %v1849 = vunpack.c.h.b16 %v1611
        %v1850 = vunpack.c.l.b16 %v1612
        %v1851 = vunpack.c.h.b16 %v1612
        %v1852 = vunpack.c.l.b16 %v1613
        %v1853 = vunpack.c.h.b16 %v1613
        %v1854 = vunpack.c.l.b16 %v1614
        %v1855 = vunpack.c.h.b16 %v1614
        %v1856 = vunpack.c.l.b16 %v1615
        %v1857 = vunpack.c.h.b16 %v1615
        %v1858 = vunpack.c.l.b16 %v1616
        %v1859 = vunpack.c.h.b16 %v1616
        %v1860 = vunpack.c.l.b16 %v1617
        %v1861 = vunpack.c.h.b16 %v1617
        %v1862 = vunpack.c.l.b16 %v1618
        %v1863 = vunpack.c.h.b16 %v1618
        %v1864 = vunpack.c.l.b16 %v1619
        %v1865 = vunpack.c.h.b16 %v1619
        %v1866 = vunpack.c.l.b16 %v1620
        %v1867 = vunpack.c.h.b16 %v1620
        %v1868 = vunpack.c.l.b16 %v1621
        %v1869 = vunpack.c.h.b16 %v1621
        %v1870 = vunpack.c.l.b16 %v1622
        %v1871 = vunpack.c.h.b16 %v1622
        %v1872 = vunpack.c.l.b16 %v1623
        %v1873 = vunpack.c.h.b16 %v1623
        %v1874 = vunpack.c.l.b16 %v1624
        %v1875 = vunpack.c.h.b16 %v1624
        %v1876 = vunpack.c.l.b16 %v1625
        %v1877 = vunpack.c.h.b16 %v1625
        %v1878 = vpack.c.b16 %v1720, %v1718
        %v1879 = vpack.c.b16 %v1721, %v1719
        %v1880 = vpack.c.b16 %v1724, %v1722
        %v1881 = vpack.c.b16 %v1725, %v1723
        %v1882 = vpack.c.b16 %v1728, %v1726
        %v1883 = vpack.c.b16 %v1729, %v1727
        %v1884 = vpack.c.b16 %v1732, %v1730
        %v1885 = vpack.c.b16 %v1733, %v1731
        %v1886 = vpack.c.b16 %v1736, %v1734
        %v1887 = vpack.c.b16 %v1737, %v1735
        %v1888 = vpack.c.b16 %v1740, %v1738
        %v1889 = vpack.c.b16 %v1741, %v1739
        %v1890 = vpack.c.b16 %v1744, %v1742
        %v1891 = vpack.c.b16 %v1745, %v1743
        %v1892 = vpack.c.b16 %v1748, %v1746
        %v1893 = vpack.c.b16 %v1749, %v1747
        %v1894 = vpack.c.b16 %v1752, %v1750
        %v1895 = vpack.c.b16 %v1753, %v1751
        %v1896 = vpack.c.b16 %v1756, %v1754
        %v1897 = vpack.c.b16 %v1757, %v1755
        %v1898 = vpack.c.b16 %v1760, %v1758
        %v1899 = vpack.c.b16 %v1761, %v1759
        %v1900 = vpack.c.b16 %v1764, %v1762
        %v1901 = vpack.c.b16 %v1765, %v1763
        %v1902 = vpack.c.b16 %v1768, %v1766
        %v1903 = vpack.c.b16 %v1769, %v1767
        %v1904 = vpack.c.b16 %v1772, %v1770
        %v1905 = vpack.c.b16 %v1773, %v1771
        %v1906 = vpack.c.b16 %v1776, %v1774
        %v1907 = vpack.c.b16 %v1777, %v1775
        %v1908 = vpack.c.b16 %v1780, %v1778
        %v1909 = vpack.c.b16 %v1781, %v1779
        %v1910 = vpack.c.b16 %v1784, %v1782
        %v1911 = vpack.c.b16 %v1785, %v1783
        %v1912 = vpack.c.b16 %v1788, %v1786
        %v1913 = vpack.c.b16 %v1789, %v1787
        %v1914 = vpack.c.b16 %v1792, %v1790
        %v1915 = vpack.c.b16 %v1793, %v1791
        %v1916 = vpack.c.b16 %v1796, %v1794
        %v1917 = vpack.c.b16 %v1797, %v1795
        %v1918 = vpack.c.b16 %v1800, %v1798
        %v1919 = vpack.c.b16 %v1801, %v1799
        %v1920 = vpack.c.b16 %v1804, %v1802
        %v1921 = vpack.c.b16 %v1805, %v1803
        %v1922 = vpack.c.b16 %v1808, %v1806
        %v1923 = vpack.c.b16 %v1809, %v1807
        %v1924 = vpack.c.b16 %v1812, %v1810
        %v1925 = vpack.c.b16 %v1813, %v1811
        %v1926 = vpack.c.b16 %v1816, %v1814
        %v1927 = vpack.c.b16 %v1817, %v1815
        %v1928 = vpack.c.b16 %v1820, %v1818
        %v1929 = vpack.c.b16 %v1821, %v1819
        %v1930 = vpack.c.b16 %v1824, %v1822
        %v1931 = vpack.c.b16 %v1825, %v1823
        %v1932 = vpack.c.b16 %v1828, %v1826
        %v1933 = vpack.c.b16 %v1829, %v1827
        %v1934 = vpack.c.b16 %v1832, %v1830
        %v1935 = vpack.c.b16 %v1833, %v1831
        %v1936 = vpack.c.b16 %v1836, %v1834
        %v1937 = vpack.c.b16 %v1837, %v1835
        %v1938 = vpack.c.b16 %v1840, %v1838
        %v1939 = vpack.c.b16 %v1841, %v1839
        %v1940 = vpack.c.b16 %v1844, %v1842
        %v1941 = vpack.c.b16 %v1845, %v1843
        %v1942 = vpack.c.b16 %v1848, %v1846
        %v1943 = vpack.c.b16 %v1849, %v1847
        %v1944 = vpack.c.b16 %v1852, %v1850
        %v1945 = vpack.c.b16 %v1853, %v1851
        %v1946 = vpack.c.b16 %v1856, %v1854
        %v1947 = vpack.c.b16 %v1857, %v1855
        %v1948 = vpack.c.b16 %v1860, %v1858
        %v1949 = vpack.c.b16 %v1861, %v1859
        %v1950 = vpack.c.b16 %v1864, %v1862
        %v1951 = vpack.c.b16 %v1865, %v1863
        %v1952 = vpack.c.b16 %v1868, %v1866
        %v1953 = vpack.c.b16 %v1869, %v1867
        %v1954 = vpack.c.b16 %v1872, %v1870
        %v1955 = vpack.c.b16 %v1873, %v1871
        %v1956 = vpack.c.b16 %v1876, %v1874
        %v1957 = vpack.c.b16 %v1877, %v1875
        %2038 = vmatprep.subr.bf16.mxu0 %v1879
        %2039 = vmatpush1.bf16.msra.mxu0 %v1878
        %2040 = vmatprep.subr.bf16.mxu0 %v1881
        %2041 = vmatpush1.bf16.msra.mxu0 %v1880
        %2042 = vmatprep.subr.bf16.mxu0 %v1883
        %2043 = vmatpush1.bf16.msra.mxu0 %v1882
        %2044 = vmatprep.subr.bf16.mxu0 %v1885
        %2045 = vmatpush1.bf16.msra.mxu0 %v1884
        %2046 = vmatprep.subr.bf16.mxu0 %v1887
        %2047 = vmatpush1.bf16.msra.mxu0 %v1886
        %2048 = vmatprep.subr.bf16.mxu0 %v1889
        %2049 = vmatpush1.bf16.msra.mxu0 %v1888
        %2050 = vmatprep.subr.bf16.mxu0 %v1891
        %2051 = vmatpush1.bf16.msra.mxu0 %v1890
        %2052 = vmatprep.subr.bf16.mxu0 %v1893
        %2053 = vmatpush1.bf16.msra.mxu0 %v1892
        %2054 = vmatprep.subr.bf16.mxu0 %v1895
        %2055 = vmatpush1.bf16.msra.mxu0 %v1894
        %2056 = vmatprep.subr.bf16.mxu0 %v1897
        %2057 = vmatpush1.bf16.msra.mxu0 %v1896
        %2058 = vmatprep.subr.bf16.mxu0 %v1899
        %2059 = vmatpush1.bf16.msra.mxu0 %v1898
        %2060 = vmatprep.subr.bf16.mxu0 %v1901
        %2061 = vmatpush1.bf16.msra.mxu0 %v1900
        %2062 = vmatprep.subr.bf16.mxu0 %v1903
        %2063 = vmatpush1.bf16.msra.mxu0 %v1902
        %2064 = vmatprep.subr.bf16.mxu0 %v1905
        %2065 = vmatpush1.bf16.msra.mxu0 %v1904
        %2066 = vmatprep.subr.bf16.mxu0 %v1907
        %2067 = vmatpush1.bf16.msra.mxu0 %v1906
        %2068 = vmatprep.subr.bf16.mxu0 %v1909
        %2069 = vmatpush1.bf16.msra.mxu0 %v1908
        %2070 = vmatprep.mubr.bf16.mxu0 %v1467
        %2071 = vmatmul.mubr.bf16.gmra.mrb[0].mxu0 %v1466
        %v2072 = vpop.f32.mrb[0].mxu0
        %v2073 = vadd.f32 %v1631, %v2072
        %v2074 = vpop.f32.mrb[0].mxu0
        %v2075 = vadd.f32 %v1635, %v2074
        %v2076 = vpop.f32.mrb[0].mxu0
        %v2077 = vadd.f32 %v1631, %v2076
        %v2078 = vpop.f32.mrb[0].mxu0
        %v2079 = vadd.f32 %v1635, %v2078
        %2080 = vmatprep.mubr.bf16.mxu0 %v1472
        %2081 = vmatmul.mubr.bf16.gmra.mrb[0].mxu0 %v1471
        %v2082 = vpop.f32.mrb[0].mxu0
        %v2083 = vadd.f32 %v1631, %v2082
        %v2084 = vpop.f32.mrb[0].mxu0
        %v2085 = vadd.f32 %v1635, %v2084
        %v2086 = vpop.f32.mrb[0].mxu0
        %v2087 = vadd.f32 %v1631, %v2086
        %v2088 = vpop.f32.mrb[0].mxu0
        %v2089 = vadd.f32 %v1635, %v2088
        %2090 = vmatprep.mubr.bf16.mxu0 %v1477
        %2091 = vmatmul.mubr.bf16.gmra.mrb[0].mxu0 %v1476
        %v2092 = vpop.f32.mrb[0].mxu0
        %v2093 = vadd.f32 %v1631, %v2092
        %v2094 = vpop.f32.mrb[0].mxu0
        %v2095 = vadd.f32 %v1635, %v2094
        %v2096 = vpop.f32.mrb[0].mxu0
        %v2097 = vadd.f32 %v1631, %v2096
        %v2098 = vpop.f32.mrb[0].mxu0
        %v2099 = vadd.f32 %v1635, %v2098
        %2100 = vmatprep.mubr.bf16.mxu0 %v1482
        %2101 = vmatmul.mubr.bf16.gmra.mrb[0].mxu0 %v1481
        %v2102 = vpop.f32.mrb[0].mxu0
        %v2103 = vadd.f32 %v1631, %v2102
        %v2104 = vpop.f32.mrb[0].mxu0
        %v2105 = vadd.f32 %v1635, %v2104
        %v2106 = vpop.f32.mrb[0].mxu0
        %v2107 = vadd.f32 %v1631, %v2106
        %v2108 = vpop.f32.mrb[0].mxu0
        %v2109 = vadd.f32 %v1635, %v2108
        %2110 = vmatprep.mubr.bf16.mxu0 %v1487
        %2111 = vmatmul.mubr.bf16.gmra.mrb[0].mxu0 %v1486
        %v2112 = vpop.f32.mrb[0].mxu0
        %v2113 = vadd.f32 %v1631, %v2112
        %v2114 = vpop.f32.mrb[0].mxu0
        %v2115 = vadd.f32 %v1635, %v2114
        %v2116 = vpop.f32.mrb[0].mxu0
        %v2117 = vadd.f32 %v1631, %v2116
        %v2118 = vpop.f32.mrb[0].mxu0
        %v2119 = vadd.f32 %v1635, %v2118
        %2120 = vmatprep.mubr.bf16.mxu0 %v1492
        %2121 = vmatmul.mubr.bf16.gmra.mrb[0].mxu0 %v1491
        %v2122 = vpop.f32.mrb[0].mxu0
        %v2123 = vadd.f32 %v1631, %v2122
        %v2124 = vpop.f32.mrb[0].mxu0
        %v2125 = vadd.f32 %v1635, %v2124
        %v2126 = vpop.f32.mrb[0].mxu0
        %v2127 = vadd.f32 %v1631, %v2126
        %v2128 = vpop.f32.mrb[0].mxu0
        %v2129 = vadd.f32 %v1635, %v2128
        %2130 = vmatprep.mubr.bf16.mxu0 %v1497
        %2131 = vmatmul.mubr.bf16.gmra.mrb[0].mxu0 %v1496
        %v2132 = vpop.f32.mrb[0].mxu0
        %v2133 = vadd.f32 %v1631, %v2132
        %v2134 = vpop.f32.mrb[0].mxu0
        %v2135 = vadd.f32 %v1635, %v2134
        %v2136 = vpop.f32.mrb[0].mxu0
        %v2137 = vadd.f32 %v1631, %v2136
        %v2138 = vpop.f32.mrb[0].mxu0
        %v2139 = vadd.f32 %v1635, %v2138
        %2140 = vmatprep.mubr.bf16.mxu0 %v1502
        %2141 = vmatmul.mubr.bf16.gmra.mrb[0].mxu0 %v1501
        %v2142 = vpop.f32.mrb[0].mxu0
        %v2143 = vadd.f32 %v1631, %v2142
        %v2144 = vpop.f32.mrb[0].mxu0
        %v2145 = vadd.f32 %v1635, %v2144
        %v2146 = vpop.f32.mrb[0].mxu0
        %v2147 = vadd.f32 %v1631, %v2146
        %v2148 = vpop.f32.mrb[0].mxu0
        %v2149 = vadd.f32 %v1635, %v2148
        %2150 = vmatprep.mubr.bf16.mxu0 %v1507
        %2151 = vmatmul.mubr.bf16.gmra.mrb[0].mxu0 %v1506
        %v2152 = vpop.f32.mrb[0].mxu0
        %v2153 = vadd.f32 %v1631, %v2152
        %v2154 = vpop.f32.mrb[0].mxu0
        %v2155 = vadd.f32 %v1635, %v2154
        %v2156 = vpop.f32.mrb[0].mxu0
        %v2157 = vadd.f32 %v1631, %v2156
        %v2158 = vpop.f32.mrb[0].mxu0
        %v2159 = vadd.f32 %v1635, %v2158
        %2160 = vmatprep.mubr.bf16.mxu0 %v1512
        %2161 = vmatmul.mubr.bf16.gmra.mrb[0].mxu0 %v1511
        %v2162 = vpop.f32.mrb[0].mxu0
        %v2163 = vadd.f32 %v1631, %v2162
        %v2164 = vpop.f32.mrb[0].mxu0
        %v2165 = vadd.f32 %v1635, %v2164
        %v2166 = vpop.f32.mrb[0].mxu0
        %v2167 = vadd.f32 %v1631, %v2166
        %v2168 = vpop.f32.mrb[0].mxu0
        %v2169 = vadd.f32 %v1635, %v2168
        %2170 = vmatprep.mubr.bf16.mxu0 %v1517
        %2171 = vmatmul.mubr.bf16.gmra.mrb[0].mxu0 %v1516
        %v2172 = vpop.f32.mrb[0].mxu0
        %v2173 = vadd.f32 %v1631, %v2172
        %v2174 = vpop.f32.mrb[0].mxu0
        %v2175 = vadd.f32 %v1635, %v2174
        %v2176 = vpop.f32.mrb[0].mxu0
        %v2177 = vadd.f32 %v1631, %v2176
        %v2178 = vpop.f32.mrb[0].mxu0
        %v2179 = vadd.f32 %v1635, %v2178
        %2180 = vmatprep.mubr.bf16.mxu0 %v1522
        %2181 = vmatmul.mubr.bf16.gmra.mrb[0].mxu0 %v1521
        %v2182 = vpop.f32.mrb[0].mxu0
        %v2183 = vadd.f32 %v1631, %v2182
        %v2184 = vpop.f32.mrb[0].mxu0
        %v2185 = vadd.f32 %v1635, %v2184
        %v2186 = vpop.f32.mrb[0].mxu0
        %v2187 = vadd.f32 %v1631, %v2186
        %v2188 = vpop.f32.mrb[0].mxu0
        %v2189 = vadd.f32 %v1635, %v2188
        %2190 = vmatprep.mubr.bf16.mxu0 %v1527
        %2191 = vmatmul.mubr.bf16.gmra.mrb[0].mxu0 %v1526
        %v2192 = vpop.f32.mrb[0].mxu0
        %v2193 = vadd.f32 %v1631, %v2192
        %v2194 = vpop.f32.mrb[0].mxu0
        %v2195 = vadd.f32 %v1635, %v2194
        %v2196 = vpop.f32.mrb[0].mxu0
        %v2197 = vadd.f32 %v1631, %v2196
        %v2198 = vpop.f32.mrb[0].mxu0
        %v2199 = vadd.f32 %v1635, %v2198
        %2200 = vmatprep.mubr.bf16.mxu0 %v1532
        %2201 = vmatmul.mubr.bf16.gmra.mrb[0].mxu0 %v1531
        %v2202 = vpop.f32.mrb[0].mxu0
        %v2203 = vadd.f32 %v1631, %v2202
        %v2204 = vpop.f32.mrb[0].mxu0
        %v2205 = vadd.f32 %v1635, %v2204
        %v2206 = vpop.f32.mrb[0].mxu0
        %v2207 = vadd.f32 %v1631, %v2206
        %v2208 = vpop.f32.mrb[0].mxu0
        %v2209 = vadd.f32 %v1635, %v2208
        %2210 = vmatprep.mubr.bf16.mxu0 %v1537
        %2211 = vmatmul.mubr.bf16.gmra.mrb[0].mxu0 %v1536
        %v2212 = vpop.f32.mrb[0].mxu0
        %v2213 = vadd.f32 %v1631, %v2212
        %v2214 = vpop.f32.mrb[0].mxu0
        %v2215 = vadd.f32 %v1635, %v2214
        %v2216 = vpop.f32.mrb[0].mxu0
        %v2217 = vadd.f32 %v1631, %v2216
        %v2218 = vpop.f32.mrb[0].mxu0
        %v2219 = vadd.f32 %v1635, %v2218
        %2220 = vmatprep.mubr.bf16.mxu0 %v1542
        %2221 = vmatmul.mubr.bf16.gmra.mrb[0].mxu0 %v1541
        %v2222 = vpop.f32.mrb[0].mxu0
        %v2223 = vadd.f32 %v1631, %v2222
        %v2224 = vpop.f32.mrb[0].mxu0
        %v2225 = vadd.f32 %v1635, %v2224
        %v2226 = vpop.f32.mrb[0].mxu0
        %v2227 = vadd.f32 %v1631, %v2226
        %v2228 = vpop.f32.mrb[0].mxu0
        %v2229 = vadd.f32 %v1635, %v2228
        %2230 = vdwg.mxu0
        %2231 = vmatprep.subr.bf16.mxu0 %v1911
        %2232 = vmatpush1.bf16.msra.mxu0 %v1910
        %2233 = vmatprep.subr.bf16.mxu0 %v1913
        %2234 = vmatpush1.bf16.msra.mxu0 %v1912
        %2235 = vmatprep.subr.bf16.mxu0 %v1915
        %2236 = vmatpush1.bf16.msra.mxu0 %v1914
        %2237 = vmatprep.subr.bf16.mxu0 %v1917
        %2238 = vmatpush1.bf16.msra.mxu0 %v1916
        %2239 = vmatprep.subr.bf16.mxu0 %v1919
        %2240 = vmatpush1.bf16.msra.mxu0 %v1918
        %2241 = vmatprep.subr.bf16.mxu0 %v1921
        %2242 = vmatpush1.bf16.msra.mxu0 %v1920
        %2243 = vmatprep.subr.bf16.mxu0 %v1923
        %2244 = vmatpush1.bf16.msra.mxu0 %v1922
        %2245 = vmatprep.subr.bf16.mxu0 %v1925
        %2246 = vmatpush1.bf16.msra.mxu0 %v1924
        %2247 = vmatprep.subr.bf16.mxu0 %v1927
        %2248 = vmatpush1.bf16.msra.mxu0 %v1926
        %2249 = vmatprep.subr.bf16.mxu0 %v1929
        %2250 = vmatpush1.bf16.msra.mxu0 %v1928
        %2251 = vmatprep.subr.bf16.mxu0 %v1931
        %2252 = vmatpush1.bf16.msra.mxu0 %v1930
        %2253 = vmatprep.subr.bf16.mxu0 %v1933
        %2254 = vmatpush1.bf16.msra.mxu0 %v1932
        %2255 = vmatprep.subr.bf16.mxu0 %v1935
        %2256 = vmatpush1.bf16.msra.mxu0 %v1934
        %2257 = vmatprep.subr.bf16.mxu0 %v1937
        %2258 = vmatpush1.bf16.msra.mxu0 %v1936
        %2259 = vmatprep.subr.bf16.mxu0 %v1939
        %2260 = vmatpush1.bf16.msra.mxu0 %v1938
        %2261 = vmatprep.subr.bf16.mxu0 %v1941
        %2262 = vmatpush1.bf16.msra.mxu0 %v1940
        %2263 = vmatprep.mubr.bf16.mxu0 %v1469
        %2264 = vmatmul.mubr.bf16.gmra.mrb[0].mxu0 %v1468
        %v2265 = vpop.f32.mrb[0].mxu0
        %v2266 = vadd.f32 %v2073, %v2265
        %v2267 = vpop.f32.mrb[0].mxu0
        %v2268 = vadd.f32 %v2075, %v2267
        %v2269 = vpop.f32.mrb[0].mxu0
        %v2270 = vadd.f32 %v2077, %v2269
        %v2271 = vpop.f32.mrb[0].mxu0
        %v2272 = vadd.f32 %v2079, %v2271
        %2273 = vmatprep.mubr.bf16.mxu0 %v1474
        %2274 = vmatmul.mubr.bf16.gmra.mrb[0].mxu0 %v1473
        %v2275 = vpop.f32.mrb[0].mxu0
        %v2276 = vadd.f32 %v2083, %v2275
        %v2277 = vpop.f32.mrb[0].mxu0
        %v2278 = vadd.f32 %v2085, %v2277
        %v2279 = vpop.f32.mrb[0].mxu0
        %v2280 = vadd.f32 %v2087, %v2279
        %v2281 = vpop.f32.mrb[0].mxu0
        %v2282 = vadd.f32 %v2089, %v2281
        %2283 = vmatprep.mubr.bf16.mxu0 %v1479
        %2284 = vmatmul.mubr.bf16.gmra.mrb[0].mxu0 %v1478
        %v2285 = vpop.f32.mrb[0].mxu0
        %v2286 = vadd.f32 %v2093, %v2285
        %v2287 = vpop.f32.mrb[0].mxu0
        %v2288 = vadd.f32 %v2095, %v2287
        %v2289 = vpop.f32.mrb[0].mxu0
        %v2290 = vadd.f32 %v2097, %v2289
        %v2291 = vpop.f32.mrb[0].mxu0
        %v2292 = vadd.f32 %v2099, %v2291
        %2293 = vmatprep.mubr.bf16.mxu0 %v1484
        %2294 = vmatmul.mubr.bf16.gmra.mrb[0].mxu0 %v1483
        %v2295 = vpop.f32.mrb[0].mxu0
        %v2296 = vadd.f32 %v2103, %v2295
        %v2297 = vpop.f32.mrb[0].mxu0
        %v2298 = vadd.f32 %v2105, %v2297
        %v2299 = vpop.f32.mrb[0].mxu0
        %v2300 = vadd.f32 %v2107, %v2299
        %v2301 = vpop.f32.mrb[0].mxu0
        %v2302 = vadd.f32 %v2109, %v2301
        %2303 = vmatprep.mubr.bf16.mxu0 %v1489
        %2304 = vmatmul.mubr.bf16.gmra.mrb[0].mxu0 %v1488
        %v2305 = vpop.f32.mrb[0].mxu0
        %v2306 = vadd.f32 %v2113, %v2305
        %v2307 = vpop.f32.mrb[0].mxu0
        %v2308 = vadd.f32 %v2115, %v2307
        %v2309 = vpop.f32.mrb[0].mxu0
        %v2310 = vadd.f32 %v2117, %v2309
        %v2311 = vpop.f32.mrb[0].mxu0
        %v2312 = vadd.f32 %v2119, %v2311
        %2313 = vmatprep.mubr.bf16.mxu0 %v1494
        %2314 = vmatmul.mubr.bf16.gmra.mrb[0].mxu0 %v1493
        %v2315 = vpop.f32.mrb[0].mxu0
        %v2316 = vadd.f32 %v2123, %v2315
        %v2317 = vpop.f32.mrb[0].mxu0
        %v2318 = vadd.f32 %v2125, %v2317
        %v2319 = vpop.f32.mrb[0].mxu0
        %v2320 = vadd.f32 %v2127, %v2319
        %v2321 = vpop.f32.mrb[0].mxu0
        %v2322 = vadd.f32 %v2129, %v2321
        %2323 = vmatprep.mubr.bf16.mxu0 %v1499
        %2324 = vmatmul.mubr.bf16.gmra.mrb[0].mxu0 %v1498
        %v2325 = vpop.f32.mrb[0].mxu0
        %v2326 = vadd.f32 %v2133, %v2325
        %v2327 = vpop.f32.mrb[0].mxu0
        %v2328 = vadd.f32 %v2135, %v2327
        %v2329 = vpop.f32.mrb[0].mxu0
        %v2330 = vadd.f32 %v2137, %v2329
        %v2331 = vpop.f32.mrb[0].mxu0
        %v2332 = vadd.f32 %v2139, %v2331
        %2333 = vmatprep.mubr.bf16.mxu0 %v1504
        %2334 = vmatmul.mubr.bf16.gmra.mrb[0].mxu0 %v1503
        %v2335 = vpop.f32.mrb[0].mxu0
        %v2336 = vadd.f32 %v2143, %v2335
        %v2337 = vpop.f32.mrb[0].mxu0
        %v2338 = vadd.f32 %v2145, %v2337
        %v2339 = vpop.f32.mrb[0].mxu0
        %v2340 = vadd.f32 %v2147, %v2339
        %v2341 = vpop.f32.mrb[0].mxu0
        %v2342 = vadd.f32 %v2149, %v2341
        %2343 = vmatprep.mubr.bf16.mxu0 %v1509
        %2344 = vmatmul.mubr.bf16.gmra.mrb[0].mxu0 %v1508
        %v2345 = vpop.f32.mrb[0].mxu0
        %v2346 = vadd.f32 %v2153, %v2345
        %v2347 = vpop.f32.mrb[0].mxu0
        %v2348 = vadd.f32 %v2155, %v2347
        %v2349 = vpop.f32.mrb[0].mxu0
        %v2350 = vadd.f32 %v2157, %v2349
        %v2351 = vpop.f32.mrb[0].mxu0
        %v2352 = vadd.f32 %v2159, %v2351
        %2353 = vmatprep.mubr.bf16.mxu0 %v1514
        %2354 = vmatmul.mubr.bf16.gmra.mrb[0].mxu0 %v1513
        %v2355 = vpop.f32.mrb[0].mxu0
        %v2356 = vadd.f32 %v2163, %v2355
        %v2357 = vpop.f32.mrb[0].mxu0
        %v2358 = vadd.f32 %v2165, %v2357
        %v2359 = vpop.f32.mrb[0].mxu0
        %v2360 = vadd.f32 %v2167, %v2359
        %v2361 = vpop.f32.mrb[0].mxu0
        %v2362 = vadd.f32 %v2169, %v2361
        %2363 = vmatprep.mubr.bf16.mxu0 %v1519
        %2364 = vmatmul.mubr.bf16.gmra.mrb[0].mxu0 %v1518
        %v2365 = vpop.f32.mrb[0].mxu0
        %v2366 = vadd.f32 %v2173, %v2365
        %v2367 = vpop.f32.mrb[0].mxu0
        %v2368 = vadd.f32 %v2175, %v2367
        %v2369 = vpop.f32.mrb[0].mxu0
        %v2370 = vadd.f32 %v2177, %v2369
        %v2371 = vpop.f32.mrb[0].mxu0
        %v2372 = vadd.f32 %v2179, %v2371
        %2373 = vmatprep.mubr.bf16.mxu0 %v1524
        %2374 = vmatmul.mubr.bf16.gmra.mrb[0].mxu0 %v1523
        %v2375 = vpop.f32.mrb[0].mxu0
        %v2376 = vadd.f32 %v2183, %v2375
        %v2377 = vpop.f32.mrb[0].mxu0
        %v2378 = vadd.f32 %v2185, %v2377
        %v2379 = vpop.f32.mrb[0].mxu0
        %v2380 = vadd.f32 %v2187, %v2379
        %v2381 = vpop.f32.mrb[0].mxu0
        %v2382 = vadd.f32 %v2189, %v2381
        %2383 = vmatprep.mubr.bf16.mxu0 %v1529
        %2384 = vmatmul.mubr.bf16.gmra.mrb[0].mxu0 %v1528
        %v2385 = vpop.f32.mrb[0].mxu0
        %v2386 = vadd.f32 %v2193, %v2385
        %v2387 = vpop.f32.mrb[0].mxu0
        %v2388 = vadd.f32 %v2195, %v2387
        %v2389 = vpop.f32.mrb[0].mxu0
        %v2390 = vadd.f32 %v2197, %v2389
        %v2391 = vpop.f32.mrb[0].mxu0
        %v2392 = vadd.f32 %v2199, %v2391
        %2393 = vmatprep.mubr.bf16.mxu0 %v1534
        %2394 = vmatmul.mubr.bf16.gmra.mrb[0].mxu0 %v1533
        %v2395 = vpop.f32.mrb[0].mxu0
        %v2396 = vadd.f32 %v2203, %v2395
        %v2397 = vpop.f32.mrb[0].mxu0
        %v2398 = vadd.f32 %v2205, %v2397
        %v2399 = vpop.f32.mrb[0].mxu0
        %v2400 = vadd.f32 %v2207, %v2399
        %v2401 = vpop.f32.mrb[0].mxu0
        %v2402 = vadd.f32 %v2209, %v2401
        %2403 = vmatprep.mubr.bf16.mxu0 %v1539
        %2404 = vmatmul.mubr.bf16.gmra.mrb[0].mxu0 %v1538
        %v2405 = vpop.f32.mrb[0].mxu0
        %v2406 = vadd.f32 %v2213, %v2405
        %v2407 = vpop.f32.mrb[0].mxu0
        %v2408 = vadd.f32 %v2215, %v2407
        %v2409 = vpop.f32.mrb[0].mxu0
        %v2410 = vadd.f32 %v2217, %v2409
        %v2411 = vpop.f32.mrb[0].mxu0
        %v2412 = vadd.f32 %v2219, %v2411
        %2413 = vmatprep.mubr.bf16.mxu0 %v1544
        %2414 = vmatmul.mubr.bf16.gmra.mrb[0].mxu0 %v1543
        %v2415 = vpop.f32.mrb[0].mxu0
        %v2416 = vadd.f32 %v2223, %v2415
        %v2417 = vpop.f32.mrb[0].mxu0
        %v2418 = vadd.f32 %v2225, %v2417
        %v2419 = vpop.f32.mrb[0].mxu0
        %v2420 = vadd.f32 %v2227, %v2419
        %v2421 = vpop.f32.mrb[0].mxu0
        %v2422 = vadd.f32 %v2229, %v2421
        %2423 = vdwg.mxu0
        %2424 = vmatprep.subr.bf16.mxu0 %v1943
        %2425 = vmatpush1.bf16.msra.mxu0 %v1942
        %2426 = vmatprep.subr.bf16.mxu0 %v1945
        %2427 = vmatpush1.bf16.msra.mxu0 %v1944
        %2428 = vmatprep.subr.bf16.mxu0 %v1947
        %2429 = vmatpush1.bf16.msra.mxu0 %v1946
        %2430 = vmatprep.subr.bf16.mxu0 %v1949
        %2431 = vmatpush1.bf16.msra.mxu0 %v1948
        %2432 = vmatprep.subr.bf16.mxu0 %v1951
        %2433 = vmatpush1.bf16.msra.mxu0 %v1950
        %2434 = vmatprep.subr.bf16.mxu0 %v1953
        %2435 = vmatpush1.bf16.msra.mxu0 %v1952
        %2436 = vmatprep.subr.bf16.mxu0 %v1955
        %2437 = vmatpush1.bf16.msra.mxu0 %v1954
        %2438 = vmatprep.subr.bf16.mxu0 %v1957
        %2439 = vmatpush1.bf16.msra.mxu0 %v1956
        %2440 = vmatprep.subr.bf16.mxu0 0
        %2441 = vmatpush1.bf16.msra.mxu0 0
        %2442 = vmatprep.subr.bf16.mxu0 0
        %2443 = vmatpush1.bf16.msra.mxu0 0
        %2444 = vmatprep.subr.bf16.mxu0 0
        %2445 = vmatpush1.bf16.msra.mxu0 0
        %2446 = vmatprep.subr.bf16.mxu0 0
        %2447 = vmatpush1.bf16.msra.mxu0 0
        %2448 = vmatprep.subr.bf16.mxu0 0
        %2449 = vmatpush1.bf16.msra.mxu0 0
        %2450 = vmatprep.subr.bf16.mxu0 0
        %2451 = vmatpush1.bf16.msra.mxu0 0
        %2452 = vmatprep.subr.bf16.mxu0 0
        %2453 = vmatpush1.bf16.msra.mxu0 0
        %2454 = vmatprep.subr.bf16.mxu0 0
        %2455 = vmatpush1.bf16.msra.mxu0 0
        %2456 = vmatprep.mubr.bf16.mxu0 0
        %2457 = vmatmul.mubr.bf16.gmra.mrb[0].mxu0 %v1470
        %v2458 = vpop.f32.mrb[0].mxu0
        %v2459 = vadd.f32 %v2266, %v2458
        %v2460 = vpop.f32.mrb[0].mxu0
        %v2461 = vadd.f32 %v2268, %v2460
        %v2462 = vpop.f32.mrb[0].mxu0
        %v2463 = vadd.f32 %v2270, %v2462
        %v2464 = vpop.f32.mrb[0].mxu0
        %v2465 = vadd.f32 %v2272, %v2464
        %2466 = vmatprep.mubr.bf16.mxu0 0
        %2467 = vmatmul.mubr.bf16.gmra.mrb[0].mxu0 %v1475
        %v2468 = vpop.f32.mrb[0].mxu0
        %v2469 = vadd.f32 %v2276, %v2468
        %v2470 = vpop.f32.mrb[0].mxu0
        %v2471 = vadd.f32 %v2278, %v2470
        %v2472 = vpop.f32.mrb[0].mxu0
        %v2473 = vadd.f32 %v2280, %v2472
        %v2474 = vpop.f32.mrb[0].mxu0
        %v2475 = vadd.f32 %v2282, %v2474
        %2476 = vmatprep.mubr.bf16.mxu0 0
        %2477 = vmatmul.mubr.bf16.gmra.mrb[0].mxu0 %v1480
        %v2478 = vpop.f32.mrb[0].mxu0
        %v2479 = vadd.f32 %v2286, %v2478
        %v2480 = vpop.f32.mrb[0].mxu0
        %v2481 = vadd.f32 %v2288, %v2480
        %v2482 = vpop.f32.mrb[0].mxu0
        %v2483 = vadd.f32 %v2290, %v2482
        %v2484 = vpop.f32.mrb[0].mxu0
        %v2485 = vadd.f32 %v2292, %v2484
        %2486 = vmatprep.mubr.bf16.mxu0 0
        %2487 = vmatmul.mubr.bf16.gmra.mrb[0].mxu0 %v1485
        %v2488 = vpop.f32.mrb[0].mxu0
        %v2489 = vadd.f32 %v2296, %v2488
        %v2490 = vpop.f32.mrb[0].mxu0
        %v2491 = vadd.f32 %v2298, %v2490
        %v2492 = vpop.f32.mrb[0].mxu0
        %v2493 = vadd.f32 %v2300, %v2492
        %v2494 = vpop.f32.mrb[0].mxu0
        %v2495 = vadd.f32 %v2302, %v2494
        %2496 = vmatprep.mubr.bf16.mxu0 0
        %2497 = vmatmul.mubr.bf16.gmra.mrb[0].mxu0 %v1490
        %v2498 = vpop.f32.mrb[0].mxu0
        %v2499 = vadd.f32 %v2306, %v2498
        %v2500 = vpop.f32.mrb[0].mxu0
        %v2501 = vadd.f32 %v2308, %v2500
        %v2502 = vpop.f32.mrb[0].mxu0
        %v2503 = vadd.f32 %v2310, %v2502
        %v2504 = vpop.f32.mrb[0].mxu0
        %v2505 = vadd.f32 %v2312, %v2504
        %2506 = vmatprep.mubr.bf16.mxu0 0
        %2507 = vmatmul.mubr.bf16.gmra.mrb[0].mxu0 %v1495
        %v2508 = vpop.f32.mrb[0].mxu0
        %v2509 = vadd.f32 %v2316, %v2508
        %v2510 = vpop.f32.mrb[0].mxu0
        %v2511 = vadd.f32 %v2318, %v2510
        %v2512 = vpop.f32.mrb[0].mxu0
        %v2513 = vadd.f32 %v2320, %v2512
        %v2514 = vpop.f32.mrb[0].mxu0
        %v2515 = vadd.f32 %v2322, %v2514
        %2516 = vmatprep.mubr.bf16.mxu0 0
        %2517 = vmatmul.mubr.bf16.gmra.mrb[0].mxu0 %v1500
        %v2518 = vpop.f32.mrb[0].mxu0
        %v2519 = vadd.f32 %v2326, %v2518
        %v2520 = vpop.f32.mrb[0].mxu0
        %v2521 = vadd.f32 %v2328, %v2520
        %v2522 = vpop.f32.mrb[0].mxu0
        %v2523 = vadd.f32 %v2330, %v2522
        %v2524 = vpop.f32.mrb[0].mxu0
        %v2525 = vadd.f32 %v2332, %v2524
        %2526 = vmatprep.mubr.bf16.mxu0 0
        %2527 = vmatmul.mubr.bf16.gmra.mrb[0].mxu0 %v1505
        %v2528 = vpop.f32.mrb[0].mxu0
        %v2529 = vadd.f32 %v2336, %v2528
        %v2530 = vpop.f32.mrb[0].mxu0
        %v2531 = vadd.f32 %v2338, %v2530
        %v2532 = vpop.f32.mrb[0].mxu0
        %v2533 = vadd.f32 %v2340, %v2532
        %v2534 = vpop.f32.mrb[0].mxu0
        %v2535 = vadd.f32 %v2342, %v2534
        %2536 = vmatprep.mubr.bf16.mxu0 0
        %2537 = vmatmul.mubr.bf16.gmra.mrb[0].mxu0 %v1510
        %v2538 = vpop.f32.mrb[0].mxu0
        %v2539 = vadd.f32 %v2346, %v2538
        %v2540 = vpop.f32.mrb[0].mxu0
        %v2541 = vadd.f32 %v2348, %v2540
        %v2542 = vpop.f32.mrb[0].mxu0
        %v2543 = vadd.f32 %v2350, %v2542
        %v2544 = vpop.f32.mrb[0].mxu0
        %v2545 = vadd.f32 %v2352, %v2544
        %2546 = vmatprep.mubr.bf16.mxu0 0
        %2547 = vmatmul.mubr.bf16.gmra.mrb[0].mxu0 %v1515
        %v2548 = vpop.f32.mrb[0].mxu0
        %v2549 = vadd.f32 %v2356, %v2548
        %v2550 = vpop.f32.mrb[0].mxu0
        %v2551 = vadd.f32 %v2358, %v2550
        %v2552 = vpop.f32.mrb[0].mxu0
        %v2553 = vadd.f32 %v2360, %v2552
        %v2554 = vpop.f32.mrb[0].mxu0
        %v2555 = vadd.f32 %v2362, %v2554
        %2556 = vmatprep.mubr.bf16.mxu0 0
        %2557 = vmatmul.mubr.bf16.gmra.mrb[0].mxu0 %v1520
        %v2558 = vpop.f32.mrb[0].mxu0
        %v2559 = vadd.f32 %v2366, %v2558
        %v2560 = vpop.f32.mrb[0].mxu0
        %v2561 = vadd.f32 %v2368, %v2560
        %v2562 = vpop.f32.mrb[0].mxu0
        %v2563 = vadd.f32 %v2370, %v2562
        %v2564 = vpop.f32.mrb[0].mxu0
        %v2565 = vadd.f32 %v2372, %v2564
        %2566 = vmatprep.mubr.bf16.mxu0 0
        %2567 = vmatmul.mubr.bf16.gmra.mrb[0].mxu0 %v1525
        %v2568 = vpop.f32.mrb[0].mxu0
        %v2569 = vadd.f32 %v2376, %v2568
        %v2570 = vpop.f32.mrb[0].mxu0
        %v2571 = vadd.f32 %v2378, %v2570
        %v2572 = vpop.f32.mrb[0].mxu0
        %v2573 = vadd.f32 %v2380, %v2572
        %v2574 = vpop.f32.mrb[0].mxu0
        %v2575 = vadd.f32 %v2382, %v2574
        %2576 = vmatprep.mubr.bf16.mxu0 0
        %2577 = vmatmul.mubr.bf16.gmra.mrb[0].mxu0 %v1530
        %v2578 = vpop.f32.mrb[0].mxu0
        %v2579 = vadd.f32 %v2386, %v2578
        %v2580 = vpop.f32.mrb[0].mxu0
        %v2581 = vadd.f32 %v2388, %v2580
        %v2582 = vpop.f32.mrb[0].mxu0
        %v2583 = vadd.f32 %v2390, %v2582
        %v2584 = vpop.f32.mrb[0].mxu0
        %v2585 = vadd.f32 %v2392, %v2584
        %2586 = vmatprep.mubr.bf16.mxu0 0
        %2587 = vmatmul.mubr.bf16.gmra.mrb[0].mxu0 %v1535
        %v2588 = vpop.f32.mrb[0].mxu0
        %v2589 = vadd.f32 %v2396, %v2588
        %v2590 = vpop.f32.mrb[0].mxu0
        %v2591 = vadd.f32 %v2398, %v2590
        %v2592 = vpop.f32.mrb[0].mxu0
        %v2593 = vadd.f32 %v2400, %v2592
        %v2594 = vpop.f32.mrb[0].mxu0
        %v2595 = vadd.f32 %v2402, %v2594
        %2596 = vmatprep.mubr.bf16.mxu0 0
        %2597 = vmatmul.mubr.bf16.gmra.mrb[0].mxu0 %v1540
        %v2598 = vpop.f32.mrb[0].mxu0
        %v2599 = vadd.f32 %v2406, %v2598
        %v2600 = vpop.f32.mrb[0].mxu0
        %v2601 = vadd.f32 %v2408, %v2600
        %v2602 = vpop.f32.mrb[0].mxu0
        %v2603 = vadd.f32 %v2410, %v2602
        %v2604 = vpop.f32.mrb[0].mxu0
        %v2605 = vadd.f32 %v2412, %v2604
        %2606 = vmatprep.mubr.bf16.mxu0 0
        %2607 = vmatmul.mubr.bf16.gmra.mrb[0].mxu0 %v1545
        %v2608 = vpop.f32.mrb[0].mxu0
        %v2609 = vadd.f32 %v2416, %v2608
        %v2610 = vpop.f32.mrb[0].mxu0
        %v2611 = vadd.f32 %v2418, %v2610
        %v2612 = vpop.f32.mrb[0].mxu0
        %v2613 = vadd.f32 %v2420, %v2612
        %v2614 = vpop.f32.mrb[0].mxu0
        %v2615 = vadd.f32 %v2422, %v2614
        %2616 = vdwg.mxu0
        %v2617 = vmul.f32 %v2459, 0.2
        %v2618 = vmul.f32 %v2463, 0.2
        %v2619 = vmul.f32 %v2469, 0.2
        %v2620 = vmul.f32 %v2473, 0.2
        %v2621 = vmul.f32 %v2479, 0.2
        %v2622 = vmul.f32 %v2483, 0.2
        %v2623 = vmul.f32 %v2489, 0.2
        %v2624 = vmul.f32 %v2493, 0.2
        %v2625 = vmul.f32 %v2499, 0.2
        %v2626 = vmul.f32 %v2503, 0.2
        %v2627 = vmul.f32 %v2509, 0.2
        %v2628 = vmul.f32 %v2513, 0.2
        %v2629 = vmul.f32 %v2519, 0.2
        %v2630 = vmul.f32 %v2523, 0.2
        %v2631 = vmul.f32 %v2529, 0.2
        %v2632 = vmul.f32 %v2533, 0.2
        %v2633 = vmul.f32 %v2539, 0.2
        %v2634 = vmul.f32 %v2543, 0.2
        %v2635 = vmul.f32 %v2549, 0.2
        %v2636 = vmul.f32 %v2553, 0.2
        %v2637 = vmul.f32 %v2559, 0.2
        %v2638 = vmul.f32 %v2563, 0.2
        %v2639 = vmul.f32 %v2569, 0.2
        %v2640 = vmul.f32 %v2573, 0.2
        %v2641 = vmul.f32 %v2579, 0.2
        %v2642 = vmul.f32 %v2583, 0.2
        %v2643 = vmul.f32 %v2589, 0.2
        %v2644 = vmul.f32 %v2593, 0.2
        %v2645 = vmul.f32 %v2599, 0.2
        %v2646 = vmul.f32 %v2603, 0.2
        %v2647 = vmul.f32 %v2609, 0.2
        %v2648 = vmul.f32 %v2613, 0.2
        %v2649 = vmax.f32 %v2459, %v2617
        %v2650 = vmax.f32 %v2463, %v2618
        %v2651 = vmax.f32 %v2469, %v2619
        %v2652 = vmax.f32 %v2473, %v2620
        %v2653 = vmax.f32 %v2479, %v2621
        %v2654 = vmax.f32 %v2483, %v2622
        %v2655 = vmax.f32 %v2489, %v2623
        %v2656 = vmax.f32 %v2493, %v2624
        %v2657 = vmax.f32 %v2499, %v2625
        %v2658 = vmax.f32 %v2503, %v2626
        %v2659 = vmax.f32 %v2509, %v2627
        %v2660 = vmax.f32 %v2513, %v2628
        %v2661 = vmax.f32 %v2519, %v2629
        %v2662 = vmax.f32 %v2523, %v2630
        %v2663 = vmax.f32 %v2529, %v2631
        %v2664 = vmax.f32 %v2533, %v2632
        %v2665 = vmax.f32 %v2539, %v2633
        %v2666 = vmax.f32 %v2543, %v2634
        %v2667 = vmax.f32 %v2549, %v2635
        %v2668 = vmax.f32 %v2553, %v2636
        %v2669 = vmax.f32 %v2559, %v2637
        %v2670 = vmax.f32 %v2563, %v2638
        %v2671 = vmax.f32 %v2569, %v2639
        %v2672 = vmax.f32 %v2573, %v2640
        %v2673 = vmax.f32 %v2579, %v2641
        %v2674 = vmax.f32 %v2583, %v2642
        %v2675 = vmax.f32 %v2589, %v2643
        %v2676 = vmax.f32 %v2593, %v2644
        %v2677 = vmax.f32 %v2599, %v2645
        %v2678 = vmax.f32 %v2603, %v2646
        %v2679 = vmax.f32 %v2609, %v2647
        %v2680 = vmax.f32 %v2613, %v2648
        %v2681 = vadd.f32 %v2649, %v2461
        %v2682 = vadd.f32 %v2650, %v2465
        %v2683 = vadd.f32 %v2651, %v2471
        %v2684 = vadd.f32 %v2652, %v2475
        %v2685 = vadd.f32 %v2653, %v2481
        %v2686 = vadd.f32 %v2654, %v2485
        %v2687 = vadd.f32 %v2655, %v2491
        %v2688 = vadd.f32 %v2656, %v2495
        %v2689 = vadd.f32 %v2657, %v2501
        %v2690 = vadd.f32 %v2658, %v2505
        %v2691 = vadd.f32 %v2659, %v2511
        %v2692 = vadd.f32 %v2660, %v2515
        %v2693 = vadd.f32 %v2661, %v2521
        %v2694 = vadd.f32 %v2662, %v2525
        %v2695 = vadd.f32 %v2663, %v2531
        %v2696 = vadd.f32 %v2664, %v2535
        %v2697 = vadd.f32 %v2665, %v2541
        %v2698 = vadd.f32 %v2666, %v2545
        %v2699 = vadd.f32 %v2667, %v2551
        %v2700 = vadd.f32 %v2668, %v2555
        %v2701 = vadd.f32 %v2669, %v2561
        %v2702 = vadd.f32 %v2670, %v2565
        %v2703 = vadd.f32 %v2671, %v2571
        %v2704 = vadd.f32 %v2672, %v2575
        %v2705 = vadd.f32 %v2673, %v2581
        %v2706 = vadd.f32 %v2674, %v2585
        %v2707 = vadd.f32 %v2675, %v2591
        %v2708 = vadd.f32 %v2676, %v2595
        %v2709 = vadd.f32 %v2677, %v2601
        %v2710 = vadd.f32 %v2678, %v2605
        %v2711 = vadd.f32 %v2679, %v2611
        %v2712 = vadd.f32 %v2680, %v2615
        %v2713 = vld [vmem:[%s3] sm:$0xff]
        %v2714 = vld [vmem:[%s3 + $0x8] sm:$0xff]
        %v2715 = vld [vmem:[%s3 + $0x10] sm:$0xff]
        %v2716 = vld [vmem:[%s3 + $0x18] sm:$0xff]
        %v2717 = vld [vmem:[%s3 + $0x20] sm:$0xff]
        %v2718 = vld [vmem:[%s3 + $0x28] sm:$0xff]
        %v2719 = vld [vmem:[%s3 + $0x30] sm:$0xff]
        %v2720 = vld [vmem:[%s3 + $0x38] sm:$0xff]
        %v2721 = vpack.c.bf16 %v2682, %v2681
        %v2722 = vpack.c.bf16 %v2684, %v2683
        %v2723 = vpack.c.bf16 %v2686, %v2685
        %v2724 = vpack.c.bf16 %v2688, %v2687
        %v2725 = vpack.c.bf16 %v2690, %v2689
        %v2726 = vpack.c.bf16 %v2692, %v2691
        %v2727 = vpack.c.bf16 %v2694, %v2693
        %v2728 = vpack.c.bf16 %v2696, %v2695
        %v2729 = vpack.c.bf16 %v2698, %v2697
        %v2730 = vpack.c.bf16 %v2700, %v2699
        %v2731 = vpack.c.bf16 %v2702, %v2701
        %v2732 = vpack.c.bf16 %v2704, %v2703
        %v2733 = vpack.c.bf16 %v2706, %v2705
        %v2734 = vpack.c.bf16 %v2708, %v2707
        %v2735 = vpack.c.bf16 %v2710, %v2709
        %v2736 = vpack.c.bf16 %v2712, %v2711
        %v2745 = vunpack.c.l.b16 %v2713
        %v2746 = vunpack.c.h.b16 %v2713
        %v2747 = vunpack.c.l.b16 %v2714
        %v2748 = vunpack.c.h.b16 %v2714
        %v2749 = vunpack.c.l.b16 %v2715
        %v2750 = vunpack.c.h.b16 %v2715
        %v2751 = vunpack.c.l.b16 %v2716
        %v2752 = vunpack.c.h.b16 %v2716
        %v2753 = vunpack.c.l.b16 %v2717
        %v2754 = vunpack.c.h.b16 %v2717
        %v2755 = vunpack.c.l.b16 %v2718
        %v2756 = vunpack.c.h.b16 %v2718
        %v2757 = vunpack.c.l.b16 %v2719
        %v2758 = vunpack.c.h.b16 %v2719
        %v2759 = vunpack.c.l.b16 %v2720
        %v2760 = vunpack.c.h.b16 %v2720
        %v2761 = vpack.c.b16 %v2747, %v2745
        %v2762 = vpack.c.b16 %v2748, %v2746
        %v2763 = vpack.c.b16 %v2751, %v2749
        %v2764 = vpack.c.b16 %v2752, %v2750
        %v2765 = vpack.c.b16 %v2755, %v2753
        %v2766 = vpack.c.b16 %v2756, %v2754
        %v2767 = vpack.c.b16 %v2759, %v2757
        %v2768 = vpack.c.b16 %v2760, %v2758
        %2777 = vmatprep.subr.bf16.mxu0 0
        %2778 = vmatpush1.bf16.msra.mxu0 %v2721
        %2779 = vmatprep.subr.bf16.mxu0 0
        %2780 = vmatpush1.bf16.msra.mxu0 %v2722
        %2781 = vmatprep.subr.bf16.mxu0 0
        %2782 = vmatpush1.bf16.msra.mxu0 %v2723
        %2783 = vmatprep.subr.bf16.mxu0 0
        %2784 = vmatpush1.bf16.msra.mxu0 %v2724
        %2785 = vmatprep.subr.bf16.mxu0 0
        %2786 = vmatpush1.bf16.msra.mxu0 %v2725
        %2787 = vmatprep.subr.bf16.mxu0 0
        %2788 = vmatpush1.bf16.msra.mxu0 %v2726
        %2789 = vmatprep.subr.bf16.mxu0 0
        %2790 = vmatpush1.bf16.msra.mxu0 %v2727
        %2791 = vmatprep.subr.bf16.mxu0 0
        %2792 = vmatpush1.bf16.msra.mxu0 %v2728
        %2793 = vmatprep.subr.bf16.mxu0 0
        %2794 = vmatpush1.bf16.msra.mxu0 %v2729
        %2795 = vmatprep.subr.bf16.mxu0 0
        %2796 = vmatpush1.bf16.msra.mxu0 %v2730
        %2797 = vmatprep.subr.bf16.mxu0 0
        %2798 = vmatpush1.bf16.msra.mxu0 %v2731
        %2799 = vmatprep.subr.bf16.mxu0 0
        %2800 = vmatpush1.bf16.msra.mxu0 %v2732
        %2801 = vmatprep.subr.bf16.mxu0 0
        %2802 = vmatpush1.bf16.msra.mxu0 %v2733
        %2803 = vmatprep.subr.bf16.mxu0 0
        %2804 = vmatpush1.bf16.msra.mxu0 %v2734
        %2805 = vmatprep.subr.bf16.mxu0 0
        %2806 = vmatpush1.bf16.msra.mxu0 %v2735
        %2807 = vmatprep.subr.bf16.mxu0 0
        %2808 = vmatpush1.bf16.msra.mxu0 %v2736
        %2809 = vmatprep.mubr.bf16.mxu0 %v2762
        %2810 = vmatmul.mubr.bf16.gmra.mrb[0].mxu0 %v2761
        %v2811 = vpop.f32.mrb[0].mxu0
        %v2812 = vadd.f32 0.0, %v2811
        %v2813 = vpop.f32.mrb[0].mxu0
        %v2814 = vpop.f32.mrb[0].mxu0
        %v2815 = vadd.f32 0.0, %v2814
        %v2816 = vpop.f32.mrb[0].mxu0
        %2817 = vmatprep.mubr.bf16.mxu0 %v2764
        %2818 = vmatmul.mubr.bf16.gmra.mrb[0].mxu0 %v2763
        %v2819 = vpop.f32.mrb[0].mxu0
        %v2820 = vadd.f32 0.0, %v2819
        %v2821 = vpop.f32.mrb[0].mxu0
        %v2822 = vpop.f32.mrb[0].mxu0
        %v2823 = vadd.f32 0.0, %v2822
        %v2824 = vpop.f32.mrb[0].mxu0
        %2825 = vmatprep.mubr.bf16.mxu0 %v2766
        %2826 = vmatmul.mubr.bf16.gmra.mrb[0].mxu0 %v2765
        %v2827 = vpop.f32.mrb[0].mxu0
        %v2828 = vadd.f32 0.0, %v2827
        %v2829 = vpop.f32.mrb[0].mxu0
        %v2830 = vpop.f32.mrb[0].mxu0
        %v2831 = vadd.f32 0.0, %v2830
        %v2832 = vpop.f32.mrb[0].mxu0
        %2833 = vmatprep.mubr.bf16.mxu0 %v2768
        %2834 = vmatmul.mubr.bf16.gmra.mrb[0].mxu0 %v2767
        %v2835 = vpop.f32.mrb[0].mxu0
        %v2836 = vadd.f32 0.0, %v2835
        %v2837 = vpop.f32.mrb[0].mxu0
        %v2838 = vpop.f32.mrb[0].mxu0
        %v2839 = vadd.f32 0.0, %v2838
        %v2840 = vpop.f32.mrb[0].mxu0
        %2841 = vdwg.mxu0
        %2842 = vst [vmem:[%s190] sm:$0xff] %v2812
        %2843 = vst [vmem:[%s190 + $0x8] sm:$0xff] %v2815
        %2844 = vst [vmem:[%s190 + $0x10] sm:$0xff] %v2820
        %2845 = vst [vmem:[%s190 + $0x18] sm:$0xff] %v2823
        %2846 = vst [vmem:[%s190 + $0x20] sm:$0xff] %v2828
        %2847 = vst [vmem:[%s190 + $0x28] sm:$0xff] %v2831
        %2848 = vst [vmem:[%s190 + $0x30] sm:$0xff] %v2836
        %2849 = vst [vmem:[%s190 + $0x38] sm:$0xff] %v2839
        %s2850 = sand.u32 %s115, 1
        %s2851 = scalar_lea.sflag [#allocation4], %s2850
        %s2852 = sand.u32 %s115, 1
        %s2853 = smul.addr %s2852, 64
        %s2854 = scalar_lea.vmem [#allocation3], %s2853
        // Predicated region
        $region37: #{disc_block_forward.1} parent=35 // pred_check
          %p2855 = pneg %p125
        $region38: #{disc_block_forward.1} parent=35 // pred_check_branch
          %2857 = sbr.rel (%p2855) target = $region40
        $region39: #{disc_block_forward.1} parent=35 // pred_region
          %s2859 = ssub.s32 1024, 1024
          %2860 = vsyncadd %s2851, %s2859
          %s2861 = smul.addr %s18, 8
          %s2862 = smul.addr %s2861, 128
          %s2863 = scalar_lea.hbm %s4, %s2862
          %s2864 = sshll.u32 %s2854, 4
          %s2865 = int_to_ptr.vmem [resolvable:$true] %s2864
          %2870 = dma.vmem_to_hbm [thread:$0]  %s2865, 1024, %s2863, %s2851, 128, 128, 8
        $region40: #{disc_block_forward.1} parent=35 // pred_fallthru
          _
      $region36: #{disc_block_forward.1} parent=5 // pred_fallthru
        _
      %p2871 = scmp.le.s32.totalorder 2, %s13
      // Predicated region
      $region41: #{disc_block_forward.1} parent=5 // pred_check
        %p2872 = pneg %p2871
      $region42: #{disc_block_forward.1} parent=5 // pred_check_branch
        %2874 = sbr.rel (%p2872) target = $region44
      $region43: #{disc_block_forward.1} parent=5 // pred_region
        %s2875 = ssub.s32 %s13, 2
        // Predicated region
        $region45: #{disc_block_forward.1} parent=43 // pred_check
          %p2876 = pneg %p131
        $region46: #{disc_block_forward.1} parent=43 // pred_check_branch
          %2878 = sbr.rel (%p2876) target = $region48
        $region47: #{disc_block_forward.1} parent=43 // pred_region
          %s2879 = sand.u32 %s116, 1
          %s2880 = scalar_lea.sflag [#allocation4], %s2879
          %s2881 = sand.u32 %s116, 1
          %s2882 = smul.addr %s2881, 64
          %s2883 = scalar_lea.vmem [#allocation3], %s2882
          %2884 = dma.done %s2880, 1024
        $region48: #{disc_block_forward.1} parent=43 // pred_fallthru
          _
      $region44: #{disc_block_forward.1} parent=5 // pred_fallthru
        _
    $region6: #{disc_block_forward.1} parent=1 // loop_footer
      %s17 = sadd.s32 1, %s13
    $region7: #{disc_block_forward.1} parent=1 // loop_footer_branch
      %12 = sbr.rel target = $region3
    $region8: #{disc_block_forward.1} parent=1 // loop_exit
      _
    %2885 = vsyncpa [#allocation4], 1
    %s2886 = scalar_lea.sflag [#allocation4], 1
    %2887 = vsyncpa %s2886, 1

</llo_original>
